<compile_context>
chip_gen: v7x
topology: tpu7x:2x2x1
jax: 0.10.0
libtpu: 0.0.40
codegen_flags: <defaults>
</compile_context>

<pallas_src>
import math

import numpy as np
import jax
import jax.numpy as jnp
from jax import lax
from jax.experimental import pallas as pl
from jax.experimental.pallas import tpu as pltpu


def _round_up(x, m):
    return ((x + m - 1) // m) * m


# ---------------------------------------------------------------------------
# Fused Pallas kernel: filter synthesis + roll-based im2col + one MXU matmul
# ---------------------------------------------------------------------------
def make_sincconv_kernel(B, K_pad, T_pad, L_pad, min_low_hz, min_band_hz,
                         sample_rate):
    n_groups = K_pad // 8

    def kernel(low_ref, band_ref, t_ref, inv2t_ref, w_ref, m_ref, x_ref,
               o_ref, patch_ref):
        # ---- band-pass filter synthesis (all vreg/VMEM resident) -----------
        low = min_low_hz + jnp.abs(low_ref[...])                       # (C_pad, 1)
        high = jnp.clip(low + min_band_hz + jnp.abs(band_ref[...]),
                        min_low_hz, sample_rate / 2.0)                 # (C_pad, 1)
        band = high - low                                              # (C_pad, 1)

        t = t_ref[...]                                                 # (1, K_pad)
        # (sin(2*pi*f_hi*t) - sin(2*pi*f_lo*t)) * (2/t) * window.  inv2t is the
        # host-precomputed 2/t (exact 0 at the center tap and in the K_pad
        # padding), so there is no per-element divide on the VALU path.  The
        # expression is even in t, so the mirrored right half of the tap
        # vectors reproduces torch.flip(band_pass_left) exactly.
        side = (jnp.sin(high * t) - jnp.sin(low * t)) * inv2t_ref[...] * w_ref[...]
        bp = side + m_ref[...] * (2.0 * band)           # center tap = 2*band
        # Exact reciprocal: one (C_pad, 1) vreg, negligible; keeps numerics
        # bit-close to the reference (approx=True would also be acceptable).
        filt = bp * (1.0 / (2.0 * band))                               # (C_pad, K_pad)

        # ---- im2col: sublane shear + uniform lane rolls ---------------------
        # patch[k, b*T_pad + t] = x[b, t + k]   (no wrap: T_pad+K_pad-1 <= L_pad)
        sub = lax.broadcasted_iota(jnp.int32, (8, L_pad), 0)           # sublane idx
        for b in range(B):                       # B is tiny; unrolled
            xb = jnp.broadcast_to(x_ref[b:b + 1, :], (8, L_pad))       # (8, L_pad)
            # shear: after these 3 steps sublane s holds x[b] rotated left by s
            for bit in (1, 2, 4):
                rolled = pltpu.roll(xb, shift=L_pad - bit, axis=1)
                xb = jnp.where((sub & bit) != 0, rolled, xb)
            # 9 groups of 8 taps: one uniform roll + one unmasked full-tile
            # store each.  (Static 9-iteration loop == fori_loop(unroll=True);
            # the instruction stream is ~30 ops, not 144.)
            for g in range(n_groups):
                blk = xb if g == 0 else pltpu.roll(xb, shift=L_pad - 8 * g, axis=1)
                patch_ref[8 * g:8 * g + 8, b * T_pad:(b + 1) * T_pad] = blk[:, :T_pad]

        # ---- single batch-fused MXU matmul, one lane-dense store ------------
        o_ref[...] = jnp.dot(filt, patch_ref[...],
                             preferred_element_type=jnp.float32)

    return kernel


# ---------------------------------------------------------------------------
# Wrapper: host-side constant buffers, padding, single pallas_call
# ---------------------------------------------------------------------------
def sincconv_forward(waveforms, low_hz_, band_hz_, *, kernel_size,
                     sample_rate=16000, min_low_hz=0.2, min_band_hz=13.0):
    B, in_ch, n_samples = waveforms.shape
    assert in_ch == 1, "SincConv only supports one input channel"

    K = kernel_size + 1 if kernel_size % 2 == 0 else kernel_size
    C = low_hz_.shape[0]
    half = K // 2
    T_out = n_samples - K + 1

    # Constant buffers the torch module builds in __init__ (input independent).
    n_lin = np.linspace(0.0, K / 2 - 1, int(K / 2))
    window = 0.54 - 0.46 * np.cos(2.0 * math.pi * n_lin / K)                 # (half,)
    n_half = 2.0 * math.pi * np.arange(-half, 0, dtype=np.float64) / sample_rate

    # Full-length tap / inv(t/2) / window / center-mask vectors.  Right halves
    # are mirrored so no flip/concat is needed inside the kernel.
    tvec = np.concatenate([n_half, [0.0], n_half[::-1]])
    inv2t = np.concatenate([2.0 / n_half, [0.0], 2.0 / n_half[::-1]])
    wvec = np.concatenate([window, [0.0], window[::-1]])
    mvec = np.zeros(K, dtype=np.float64)
    mvec[half] = 1.0

    # Pad everything to TPU-friendly tiles.
    C_pad = _round_up(C, 8)
    K_pad = _round_up(K, 8)
    T_pad = _round_up(T_out, 128)
    L_pad = _round_up(max(n_samples, K_pad - 1 + T_pad), 128)

    def padk(v):  # zero-pad tap vectors -> padded taps give exactly-zero filters
        return np.pad(v, (0, K_pad - K))[None, :].astype(np.float32)

    tvec, inv2t, wvec, mvec = padk(tvec), padk(inv2t), padk(wvec), padk(mvec)

    low_p = jnp.pad(low_hz_.astype(jnp.float32), ((0, C_pad - C), (0, 0)))
    band_p = jnp.pad(band_hz_.astype(jnp.float32), ((0, C_pad - C), (0, 0)))
    x_p = jnp.pad(waveforms[:, 0, :].astype(jnp.float32),
                  ((0, 0), (0, L_pad - n_samples)))

    vmem = pl.BlockSpec(memory_space=pltpu.MemorySpace.VMEM)
    kernel = make_sincconv_kernel(B, K_pad, T_pad, L_pad, float(min_low_hz),
                                  float(min_band_hz), float(sample_rate))

    cost = pl.CostEstimate(
        flops=2 * B * C * K * T_out,
        transcendentals=2 * C * K,
        bytes_accessed=4 * (B * n_samples + B * C * T_out + 2 * C + 4 * K),
    )

    out_slab = pl.pallas_call(
        kernel,
        out_shape=jax.ShapeDtypeStruct((C_pad, B * T_pad), jnp.float32),
        in_specs=[vmem] * 7,
        out_specs=vmem,
        scratch_shapes=[pltpu.VMEM((K_pad, B * T_pad), jnp.float32)],  # im2col
        cost_estimate=cost,
    )(low_p, band_p, jnp.asarray(tvec), jnp.asarray(inv2t),
      jnp.asarray(wvec), jnp.asarray(mvec), x_p)

    # (C_pad, B*T_pad) lane-dense slab -> (B, C, T_out)
    out = out_slab.reshape(C_pad, B, T_pad).transpose(1, 0, 2)
    return out[:, :C, :T_out]


# ---------------------------------------------------------------------------
# Pure-JAX reference (mirrors the torch forward op-for-op) for verification
# ---------------------------------------------------------------------------
def sincconv_reference(waveforms, low_hz_, band_hz_, *, kernel_size,
                       sample_rate=16000, min_low_hz=0.2, min_band_hz=13.0):
    K = kernel_size + 1 if kernel_size % 2 == 0 else kernel_size
    half = K // 2
    n_lin = np.linspace(0.0, K / 2 - 1, int(K / 2))
    window = jnp.asarray(0.54 - 0.46 * np.cos(2.0 * math.pi * n_lin / K), jnp.float32)
    n_ = jnp.asarray(
        (2.0 * math.pi * np.arange(-half, 0, dtype=np.float64) / sample_rate)[None, :],
        jnp.float32)

    low = min_low_hz + jnp.abs(low_hz_)
    high = jnp.clip(low + min_band_hz + jnp.abs(band_hz_), min_low_hz, sample_rate / 2)
    band = (high - low)[:, 0]

    f_low = low @ n_
    f_high = high @ n_
    bpl = (jnp.sin(f_high) - jnp.sin(f_low)) / (n_ / 2) * window
    bpc = 2.0 * band[:, None]
    bpr = jnp.flip(bpl, axis=1)
    bp = jnp.concatenate([bpl, bpc, bpr], axis=1) / (2.0 * band[:, None])
    filters = bp[:, None, :]                                   # (C, 1, K)

    return jax.lax.conv_general_dilated(
        waveforms, filters, window_strides=(1,), padding='VALID',
        dimension_numbers=('NCH', 'OIH', 'NCH'))


if __name__ == "__main__":
    # Module hyper-parameters (small, consistent with SincNet usage)
    out_channels = 16
    kernel_size = 64          # module bumps even kernel sizes -> 65
    sample_rate = 16000
    min_low_hz = 0.2
    min_band_hz_arg = 8       # module adds 5 in __init__ -> effective 13
    eff_min_band_hz = float(min_band_hz_arg + 5)

    B = 2
    n_samples = 400

    # Parameter init exactly as SincConv_fast_my.__init__
    def to_mel(hz):
        return 2595.0 * np.log10(1.0 + hz / 700.0)

    def to_hz(mel):
        return 700.0 * (10.0 ** (mel / 2595.0) - 1.0)

    low0, high0 = min_low_hz, min_low_hz + 5.0
    mel = np.linspace(to_mel(low0), to_mel(high0), out_channels + 1)
    hz = to_hz(mel)
    low_hz_ = jnp.asarray(hz[:-1].reshape(-1, 1), jnp.float32)
    band_hz_ = jnp.asarray(np.diff(hz).reshape(-1, 1), jnp.float32)

    key = jax.random.PRNGKey(0)
    waveforms = jax.random.normal(key, (B, 1, n_samples), jnp.float32)

    out = sincconv_forward(waveforms, low_hz_, band_hz_, kernel_size=kernel_size,
                           sample_rate=sample_rate, min_low_hz=min_low_hz,
                           min_band_hz=eff_min_band_hz)
    out = jax.block_until_ready(out)

    ref = sincconv_reference(waveforms, low_hz_, band_hz_, kernel_size=kernel_size,
                             sample_rate=sample_rate, min_low_hz=min_low_hz,
                             min_band_hz=eff_min_band_hz)

    K_odd = kernel_size + 1
    assert out.shape == (B, out_channels, n_samples - K_odd + 1), out.shape
    max_err = float(jnp.max(jnp.abs(out - ref)))
    assert jnp.allclose(out, ref, atol=1e-3, rtol=1e-3), \
        f"mismatch vs reference, max_err={max_err}"

    print("KERNEL_OK")
</pallas_src>

<mosaic_0001>
module attributes {stable_mosaic.version = 11 : i64} {
  func.func @kernel(%arg0: memref<16x1xf32, #tpu.memory_space<vmem>>, %arg1: memref<16x1xf32, #tpu.memory_space<vmem>>, %arg2: memref<1x72xf32, #tpu.memory_space<vmem>>, %arg3: memref<1x72xf32, #tpu.memory_space<vmem>>, %arg4: memref<1x72xf32, #tpu.memory_space<vmem>>, %arg5: memref<1x72xf32, #tpu.memory_space<vmem>>, %arg6: memref<2x512xf32, #tpu.memory_space<vmem>>, %arg7: memref<16x768xf32, #tpu.memory_space<vmem>>, %arg8: memref<72x768xf32, #tpu.memory_space<vmem>>) attributes {dimension_semantics = [], scalar_prefetch = 0 : i64, scratch_operands = 1 : i64, tpu.core_type = #tpu.core_type<tc>} {
    %c0 = arith.constant 0 : index
    %c0_0 = arith.constant 0 : index
    %0 = vector.load %arg0[%c0, %c0_0] : memref<16x1xf32, #tpu.memory_space<vmem>>, vector<16x1xf32>
    %1 = math.absf %0 : vector<16x1xf32>
    %cst = arith.constant 2.000000e-01 : f32
    %2 = vector.broadcast %cst : f32 to vector<16x1xf32>
    %3 = arith.addf %2, %1 : vector<16x1xf32>
    %cst_1 = arith.constant 1.300000e+01 : f32
    %4 = vector.broadcast %cst_1 : f32 to vector<16x1xf32>
    %5 = arith.addf %3, %4 : vector<16x1xf32>
    %c0_2 = arith.constant 0 : index
    %c0_3 = arith.constant 0 : index
    %6 = vector.load %arg1[%c0_2, %c0_3] : memref<16x1xf32, #tpu.memory_space<vmem>>, vector<16x1xf32>
    %7 = math.absf %6 : vector<16x1xf32>
    %8 = arith.addf %5, %7 : vector<16x1xf32>
    %cst_4 = arith.constant 2.000000e-01 : f32
    %cst_5 = arith.constant 8.000000e+03 : f32
    %9 = vector.broadcast %cst_4 : f32 to vector<16x1xf32>
    %10 = arith.maximumf %9, %8 : vector<16x1xf32>
    %11 = vector.broadcast %cst_5 : f32 to vector<16x1xf32>
    %12 = arith.minimumf %11, %10 : vector<16x1xf32>
    %13 = arith.subf %12, %3 : vector<16x1xf32>
    %c0_6 = arith.constant 0 : index
    %c0_7 = arith.constant 0 : index
    %14 = vector.load %arg2[%c0_6, %c0_7] : memref<1x72xf32, #tpu.memory_space<vmem>>, vector<1x72xf32>
    %15 = vector.broadcast %12 : vector<16x1xf32> to vector<16x72xf32>
    %16 = vector.broadcast %14 : vector<1x72xf32> to vector<16x72xf32>
    %17 = arith.mulf %15, %16 : vector<16x72xf32>
    %18 = math.sin %17 : vector<16x72xf32>
    %19 = vector.broadcast %3 : vector<16x1xf32> to vector<16x72xf32>
    %20 = vector.broadcast %14 : vector<1x72xf32> to vector<16x72xf32>
    %21 = arith.mulf %19, %20 : vector<16x72xf32>
    %22 = math.sin %21 : vector<16x72xf32>
    %23 = arith.subf %18, %22 : vector<16x72xf32>
    %c0_8 = arith.constant 0 : index
    %c0_9 = arith.constant 0 : index
    %24 = vector.load %arg3[%c0_8, %c0_9] : memref<1x72xf32, #tpu.memory_space<vmem>>, vector<1x72xf32>
    %25 = vector.broadcast %24 : vector<1x72xf32> to vector<16x72xf32>
    %26 = arith.mulf %23, %25 : vector<16x72xf32>
    %c0_10 = arith.constant 0 : index
    %c0_11 = arith.constant 0 : index
    %27 = vector.load %arg4[%c0_10, %c0_11] : memref<1x72xf32, #tpu.memory_space<vmem>>, vector<1x72xf32>
    %28 = vector.broadcast %27 : vector<1x72xf32> to vector<16x72xf32>
    %29 = arith.mulf %26, %28 : vector<16x72xf32>
    %c0_12 = arith.constant 0 : index
    %c0_13 = arith.constant 0 : index
    %30 = vector.load %arg5[%c0_12, %c0_13] : memref<1x72xf32, #tpu.memory_space<vmem>>, vector<1x72xf32>
    %cst_14 = arith.constant 2.000000e+00 : f32
    %31 = vector.broadcast %cst_14 : f32 to vector<16x1xf32>
    %32 = arith.mulf %31, %13 : vector<16x1xf32>
    %33 = vector.broadcast %30 : vector<1x72xf32> to vector<16x72xf32>
    %34 = vector.broadcast %32 : vector<16x1xf32> to vector<16x72xf32>
    %35 = arith.mulf %33, %34 : vector<16x72xf32>
    %36 = arith.addf %29, %35 : vector<16x72xf32>
    %cst_15 = arith.constant 2.000000e+00 : f32
    %37 = vector.broadcast %cst_15 : f32 to vector<16x1xf32>
    %38 = arith.mulf %37, %13 : vector<16x1xf32>
    %cst_16 = arith.constant 1.000000e+00 : f32
    %39 = vector.broadcast %cst_16 : f32 to vector<16x1xf32>
    %40 = arith.divf %39, %38 : vector<16x1xf32>
    %41 = vector.broadcast %40 : vector<16x1xf32> to vector<16x72xf32>
    %42 = arith.mulf %36, %41 : vector<16x72xf32>
    %43 = tpu.iota {dimensions = array<i32: 0>} : vector<8x512xi32>
    %c0_17 = arith.constant 0 : index
    %c0_18 = arith.constant 0 : index
    %44 = vector.load %arg6[%c0_17, %c0_18] : memref<2x512xf32, #tpu.memory_space<vmem>>, vector<1x512xf32>
    %45 = vector.shape_cast %44 : vector<1x512xf32> to vector<1x512xf32>
    %46 = vector.broadcast %45 : vector<1x512xf32> to vector<8x512xf32>
    %c511_i32 = arith.constant 511 : i32
    %47 = tpu.dynamic_rotate %46 by %c511_i32 dim 1 : vector<8x512xf32>, i32 -> vector<8x512xf32>
    %c1_i32 = arith.constant 1 : i32
    %48 = vector.broadcast %c1_i32 : i32 to vector<8x512xi32>
    %49 = arith.andi %43, %48 : vector<8x512xi32>
    %c0_i32 = arith.constant 0 : i32
    %50 = vector.broadcast %c0_i32 : i32 to vector<8x512xi32>
    %51 = arith.cmpi ne, %49, %50 : vector<8x512xi32>
    %52 = arith.select %51, %47, %46 : vector<8x512xi1>, vector<8x512xf32>
    %c510_i32 = arith.constant 510 : i32
    %53 = tpu.dynamic_rotate %52 by %c510_i32 dim 1 : vector<8x512xf32>, i32 -> vector<8x512xf32>
    %c2_i32 = arith.constant 2 : i32
    %54 = vector.broadcast %c2_i32 : i32 to vector<8x512xi32>
    %55 = arith.andi %43, %54 : vector<8x512xi32>
    %c0_i32_19 = arith.constant 0 : i32
    %56 = vector.broadcast %c0_i32_19 : i32 to vector<8x512xi32>
    %57 = arith.cmpi ne, %55, %56 : vector<8x512xi32>
    %58 = arith.select %57, %53, %52 : vector<8x512xi1>, vector<8x512xf32>
    %c508_i32 = arith.constant 508 : i32
    %59 = tpu.dynamic_rotate %58 by %c508_i32 dim 1 : vector<8x512xf32>, i32 -> vector<8x512xf32>
    %c4_i32 = arith.constant 4 : i32
    %60 = vector.broadcast %c4_i32 : i32 to vector<8x512xi32>
    %61 = arith.andi %43, %60 : vector<8x512xi32>
    %c0_i32_20 = arith.constant 0 : i32
    %62 = vector.broadcast %c0_i32_20 : i32 to vector<8x512xi32>
    %63 = arith.cmpi ne, %61, %62 : vector<8x512xi32>
    %64 = arith.select %63, %59, %58 : vector<8x512xi1>, vector<8x512xf32>
    %65 = vector.extract_strided_slice %64 {offsets = [0, 0], sizes = [8, 384], strides = [1, 1]} : vector<8x512xf32> to vector<8x384xf32>
    %c0_21 = arith.constant 0 : index
    %c0_22 = arith.constant 0 : index
    %66 = vector.load %arg8[%c0_21, %c0_22] : memref<72x768xf32, #tpu.memory_space<vmem>>, vector<8x384xf32>
    tpu.vector_store %arg8[%c0_21, %c0_22], %65 {strides = array<i32>} : memref<72x768xf32, #tpu.memory_space<vmem>>, vector<8x384xf32>,
    %c504_i32 = arith.constant 504 : i32
    %67 = tpu.dynamic_rotate %64 by %c504_i32 dim 1 : vector<8x512xf32>, i32 -> vector<8x512xf32>
    %68 = vector.extract_strided_slice %67 {offsets = [0, 0], sizes = [8, 384], strides = [1, 1]} : vector<8x512xf32> to vector<8x384xf32>
    %c8 = arith.constant 8 : index
    %c0_23 = arith.constant 0 : index
    %69 = vector.load %arg8[%c8, %c0_23] : memref<72x768xf32, #tpu.memory_space<vmem>>, vector<8x384xf32>
    tpu.vector_store %arg8[%c8, %c0_23], %68 {strides = array<i32>} : memref<72x768xf32, #tpu.memory_space<vmem>>, vector<8x384xf32>,
    %c496_i32 = arith.constant 496 : i32
    %70 = tpu.dynamic_rotate %64 by %c496_i32 dim 1 : vector<8x512xf32>, i32 -> vector<8x512xf32>
    %71 = vector.extract_strided_slice %70 {offsets = [0, 0], sizes = [8, 384], strides = [1, 1]} : vector<8x512xf32> to vector<8x384xf32>
    %c16 = arith.constant 16 : index
    %c0_24 = arith.constant 0 : index
    %72 = vector.load %arg8[%c16, %c0_24] : memref<72x768xf32, #tpu.memory_space<vmem>>, vector<8x384xf32>
    tpu.vector_store %arg8[%c16, %c0_24], %71 {strides = array<i32>} : memref<72x768xf32, #tpu.memory_space<vmem>>, vector<8x384xf32>,
    %c488_i32 = arith.constant 488 : i32
    %73 = tpu.dynamic_rotate %64 by %c488_i32 dim 1 : vector<8x512xf32>, i32 -> vector<8x512xf32>
    %74 = vector.extract_strided_slice %73 {offsets = [0, 0], sizes = [8, 384], strides = [1, 1]} : vector<8x512xf32> to vector<8x384xf32>
    %c24 = arith.constant 24 : index
    %c0_25 = arith.constant 0 : index
    %75 = vector.load %arg8[%c24, %c0_25] : memref<72x768xf32, #tpu.memory_space<vmem>>, vector<8x384xf32>
    tpu.vector_store %arg8[%c24, %c0_25], %74 {strides = array<i32>} : memref<72x768xf32, #tpu.memory_space<vmem>>, vector<8x384xf32>,
    %c480_i32 = arith.constant 480 : i32
    %76 = tpu.dynamic_rotate %64 by %c480_i32 dim 1 : vector<8x512xf32>, i32 -> vector<8x512xf32>
    %77 = vector.extract_strided_slice %76 {offsets = [0, 0], sizes = [8, 384], strides = [1, 1]} : vector<8x512xf32> to vector<8x384xf32>
    %c32 = arith.constant 32 : index
    %c0_26 = arith.constant 0 : index
    %78 = vector.load %arg8[%c32, %c0_26] : memref<72x768xf32, #tpu.memory_space<vmem>>, vector<8x384xf32>
    tpu.vector_store %arg8[%c32, %c0_26], %77 {strides = array<i32>} : memref<72x768xf32, #tpu.memory_space<vmem>>, vector<8x384xf32>,
    %c472_i32 = arith.constant 472 : i32
    %79 = tpu.dynamic_rotate %64 by %c472_i32 dim 1 : vector<8x512xf32>, i32 -> vector<8x512xf32>
    %80 = vector.extract_strided_slice %79 {offsets = [0, 0], sizes = [8, 384], strides = [1, 1]} : vector<8x512xf32> to vector<8x384xf32>
    %c40 = arith.constant 40 : index
    %c0_27 = arith.constant 0 : index
    %81 = vector.load %arg8[%c40, %c0_27] : memref<72x768xf32, #tpu.memory_space<vmem>>, vector<8x384xf32>
    tpu.vector_store %arg8[%c40, %c0_27], %80 {strides = array<i32>} : memref<72x768xf32, #tpu.memory_space<vmem>>, vector<8x384xf32>,
    %c464_i32 = arith.constant 464 : i32
    %82 = tpu.dynamic_rotate %64 by %c464_i32 dim 1 : vector<8x512xf32>, i32 -> vector<8x512xf32>
    %83 = vector.extract_strided_slice %82 {offsets = [0, 0], sizes = [8, 384], strides = [1, 1]} : vector<8x512xf32> to vector<8x384xf32>
    %c48 = arith.constant 48 : index
    %c0_28 = arith.constant 0 : index
    %84 = vector.load %arg8[%c48, %c0_28] : memref<72x768xf32, #tpu.memory_space<vmem>>, vector<8x384xf32>
    tpu.vector_store %arg8[%c48, %c0_28], %83 {strides = array<i32>} : memref<72x768xf32, #tpu.memory_space<vmem>>, vector<8x384xf32>,
    %c456_i32 = arith.constant 456 : i32
    %85 = tpu.dynamic_rotate %64 by %c456_i32 dim 1 : vector<8x512xf32>, i32 -> vector<8x512xf32>
    %86 = vector.extract_strided_slice %85 {offsets = [0, 0], sizes = [8, 384], strides = [1, 1]} : vector<8x512xf32> to vector<8x384xf32>
    %c56 = arith.constant 56 : index
    %c0_29 = arith.constant 0 : index
    %87 = vector.load %arg8[%c56, %c0_29] : memref<72x768xf32, #tpu.memory_space<vmem>>, vector<8x384xf32>
    tpu.vector_store %arg8[%c56, %c0_29], %86 {strides = array<i32>} : memref<72x768xf32, #tpu.memory_space<vmem>>, vector<8x384xf32>,
    %c448_i32 = arith.constant 448 : i32
    %88 = tpu.dynamic_rotate %64 by %c448_i32 dim 1 : vector<8x512xf32>, i32 -> vector<8x512xf32>
    %89 = vector.extract_strided_slice %88 {offsets = [0, 0], sizes = [8, 384], strides = [1, 1]} : vector<8x512xf32> to vector<8x384xf32>
    %c64 = arith.constant 64 : index
    %c0_30 = arith.constant 0 : index
    %90 = vector.load %arg8[%c64, %c0_30] : memref<72x768xf32, #tpu.memory_space<vmem>>, vector<8x384xf32>
    tpu.vector_store %arg8[%c64, %c0_30], %89 {strides = array<i32>} : memref<72x768xf32, #tpu.memory_space<vmem>>, vector<8x384xf32>,
    %c1 = arith.constant 1 : index
    %c0_31 = arith.constant 0 : index
    %91 = vector.load %arg6[%c1, %c0_31] : memref<2x512xf32, #tpu.memory_space<vmem>>, vector<1x512xf32>
    %92 = vector.shape_cast %91 : vector<1x512xf32> to vector<1x512xf32>
    %93 = vector.broadcast %92 : vector<1x512xf32> to vector<8x512xf32>
    %c511_i32_32 = arith.constant 511 : i32
    %94 = tpu.dynamic_rotate %93 by %c511_i32_32 dim 1 : vector<8x512xf32>, i32 -> vector<8x512xf32>
    %c1_i32_33 = arith.constant 1 : i32
    %95 = vector.broadcast %c1_i32_33 : i32 to vector<8x512xi32>
    %96 = arith.andi %43, %95 : vector<8x512xi32>
    %c0_i32_34 = arith.constant 0 : i32
    %97 = vector.broadcast %c0_i32_34 : i32 to vector<8x512xi32>
    %98 = arith.cmpi ne, %96, %97 : vector<8x512xi32>
    %99 = arith.select %98, %94, %93 : vector<8x512xi1>, vector<8x512xf32>
    %c510_i32_35 = arith.constant 510 : i32
    %100 = tpu.dynamic_rotate %99 by %c510_i32_35 dim 1 : vector<8x512xf32>, i32 -> vector<8x512xf32>
    %c2_i32_36 = arith.constant 2 : i32
    %101 = vector.broadcast %c2_i32_36 : i32 to vector<8x512xi32>
    %102 = arith.andi %43, %101 : vector<8x512xi32>
    %c0_i32_37 = arith.constant 0 : i32
    %103 = vector.broadcast %c0_i32_37 : i32 to vector<8x512xi32>
    %104 = arith.cmpi ne, %102, %103 : vector<8x512xi32>
    %105 = arith.select %104, %100, %99 : vector<8x512xi1>, vector<8x512xf32>
    %c508_i32_38 = arith.constant 508 : i32
    %106 = tpu.dynamic_rotate %105 by %c508_i32_38 dim 1 : vector<8x512xf32>, i32 -> vector<8x512xf32>
    %c4_i32_39 = arith.constant 4 : i32
    %107 = vector.broadcast %c4_i32_39 : i32 to vector<8x512xi32>
    %108 = arith.andi %43, %107 : vector<8x512xi32>
    %c0_i32_40 = arith.constant 0 : i32
    %109 = vector.broadcast %c0_i32_40 : i32 to vector<8x512xi32>
    %110 = arith.cmpi ne, %108, %109 : vector<8x512xi32>
    %111 = arith.select %110, %106, %105 : vector<8x512xi1>, vector<8x512xf32>
    %112 = vector.extract_strided_slice %111 {offsets = [0, 0], sizes = [8, 384], strides = [1, 1]} : vector<8x512xf32> to vector<8x384xf32>
    %c0_41 = arith.constant 0 : index
    %c384 = arith.constant 384 : index
    %113 = vector.load %arg8[%c0_41, %c384] : memref<72x768xf32, #tpu.memory_space<vmem>>, vector<8x384xf32>
    tpu.vector_store %arg8[%c0_41, %c384], %112 {strides = array<i32>} : memref<72x768xf32, #tpu.memory_space<vmem>>, vector<8x384xf32>,
    %c504_i32_42 = arith.constant 504 : i32
    %114 = tpu.dynamic_rotate %111 by %c504_i32_42 dim 1 : vector<8x512xf32>, i32 -> vector<8x512xf32>
    %115 = vector.extract_strided_slice %114 {offsets = [0, 0], sizes = [8, 384], strides = [1, 1]} : vector<8x512xf32> to vector<8x384xf32>
    %c8_43 = arith.constant 8 : index
    %c384_44 = arith.constant 384 : index
    %116 = vector.load %arg8[%c8_43, %c384_44] : memref<72x768xf32, #tpu.memory_space<vmem>>, vector<8x384xf32>
    tpu.vector_store %arg8[%c8_43, %c384_44], %115 {strides = array<i32>} : memref<72x768xf32, #tpu.memory_space<vmem>>, vector<8x384xf32>,
    %c496_i32_45 = arith.constant 496 : i32
    %117 = tpu.dynamic_rotate %111 by %c496_i32_45 dim 1 : vector<8x512xf32>, i32 -> vector<8x512xf32>
    %118 = vector.extract_strided_slice %117 {offsets = [0, 0], sizes = [8, 384], strides = [1, 1]} : vector<8x512xf32> to vector<8x384xf32>
    %c16_46 = arith.constant 16 : index
    %c384_47 = arith.constant 384 : index
    %119 = vector.load %arg8[%c16_46, %c384_47] : memref<72x768xf32, #tpu.memory_space<vmem>>, vector<8x384xf32>
    tpu.vector_store %arg8[%c16_46, %c384_47], %118 {strides = array<i32>} : memref<72x768xf32, #tpu.memory_space<vmem>>, vector<8x384xf32>,
    %c488_i32_48 = arith.constant 488 : i32
    %120 = tpu.dynamic_rotate %111 by %c488_i32_48 dim 1 : vector<8x512xf32>, i32 -> vector<8x512xf32>
    %121 = vector.extract_strided_slice %120 {offsets = [0, 0], sizes = [8, 384], strides = [1, 1]} : vector<8x512xf32> to vector<8x384xf32>
    %c24_49 = arith.constant 24 : index
    %c384_50 = arith.constant 384 : index
    %122 = vector.load %arg8[%c24_49, %c384_50] : memref<72x768xf32, #tpu.memory_space<vmem>>, vector<8x384xf32>
    tpu.vector_store %arg8[%c24_49, %c384_50], %121 {strides = array<i32>} : memref<72x768xf32, #tpu.memory_space<vmem>>, vector<8x384xf32>,
    %c480_i32_51 = arith.constant 480 : i32
    %123 = tpu.dynamic_rotate %111 by %c480_i32_51 dim 1 : vector<8x512xf32>, i32 -> vector<8x512xf32>
    %124 = vector.extract_strided_slice %123 {offsets = [0, 0], sizes = [8, 384], strides = [1, 1]} : vector<8x512xf32> to vector<8x384xf32>
    %c32_52 = arith.constant 32 : index
    %c384_53 = arith.constant 384 : index
    %125 = vector.load %arg8[%c32_52, %c384_53] : memref<72x768xf32, #tpu.memory_space<vmem>>, vector<8x384xf32>
    tpu.vector_store %arg8[%c32_52, %c384_53], %124 {strides = array<i32>} : memref<72x768xf32, #tpu.memory_space<vmem>>, vector<8x384xf32>,
    %c472_i32_54 = arith.constant 472 : i32
    %126 = tpu.dynamic_rotate %111 by %c472_i32_54 dim 1 : vector<8x512xf32>, i32 -> vector<8x512xf32>
    %127 = vector.extract_strided_slice %126 {offsets = [0, 0], sizes = [8, 384], strides = [1, 1]} : vector<8x512xf32> to vector<8x384xf32>
    %c40_55 = arith.constant 40 : index
    %c384_56 = arith.constant 384 : index
    %128 = vector.load %arg8[%c40_55, %c384_56] : memref<72x768xf32, #tpu.memory_space<vmem>>, vector<8x384xf32>
    tpu.vector_store %arg8[%c40_55, %c384_56], %127 {strides = array<i32>} : memref<72x768xf32, #tpu.memory_space<vmem>>, vector<8x384xf32>,
    %c464_i32_57 = arith.constant 464 : i32
    %129 = tpu.dynamic_rotate %111 by %c464_i32_57 dim 1 : vector<8x512xf32>, i32 -> vector<8x512xf32>
    %130 = vector.extract_strided_slice %129 {offsets = [0, 0], sizes = [8, 384], strides = [1, 1]} : vector<8x512xf32> to vector<8x384xf32>
    %c48_58 = arith.constant 48 : index
    %c384_59 = arith.constant 384 : index
    %131 = vector.load %arg8[%c48_58, %c384_59] : memref<72x768xf32, #tpu.memory_space<vmem>>, vector<8x384xf32>
    tpu.vector_store %arg8[%c48_58, %c384_59], %130 {strides = array<i32>} : memref<72x768xf32, #tpu.memory_space<vmem>>, vector<8x384xf32>,
    %c456_i32_60 = arith.constant 456 : i32
    %132 = tpu.dynamic_rotate %111 by %c456_i32_60 dim 1 : vector<8x512xf32>, i32 -> vector<8x512xf32>
    %133 = vector.extract_strided_slice %132 {offsets = [0, 0], sizes = [8, 384], strides = [1, 1]} : vector<8x512xf32> to vector<8x384xf32>
    %c56_61 = arith.constant 56 : index
    %c384_62 = arith.constant 384 : index
    %134 = vector.load %arg8[%c56_61, %c384_62] : memref<72x768xf32, #tpu.memory_space<vmem>>, vector<8x384xf32>
    tpu.vector_store %arg8[%c56_61, %c384_62], %133 {strides = array<i32>} : memref<72x768xf32, #tpu.memory_space<vmem>>, vector<8x384xf32>,
    %c448_i32_63 = arith.constant 448 : i32
    %135 = tpu.dynamic_rotate %111 by %c448_i32_63 dim 1 : vector<8x512xf32>, i32 -> vector<8x512xf32>
    %136 = vector.extract_strided_slice %135 {offsets = [0, 0], sizes = [8, 384], strides = [1, 1]} : vector<8x512xf32> to vector<8x384xf32>
    %c64_64 = arith.constant 64 : index
    %c384_65 = arith.constant 384 : index
    %137 = vector.load %arg8[%c64_64, %c384_65] : memref<72x768xf32, #tpu.memory_space<vmem>>, vector<8x384xf32>
    tpu.vector_store %arg8[%c64_64, %c384_65], %136 {strides = array<i32>} : memref<72x768xf32, #tpu.memory_space<vmem>>, vector<8x384xf32>,
    %c0_66 = arith.constant 0 : index
    %c0_67 = arith.constant 0 : index
    %138 = vector.load %arg8[%c0_66, %c0_67] : memref<72x768xf32, #tpu.memory_space<vmem>>, vector<72x768xf32>
    %cst_68 = arith.constant dense<0.000000e+00> : vector<16x768xf32>
    %139 = tpu.matmul %42, %138, %cst_68 {dimension_numbers = #tpu.dot_dimension_numbers<[1], [0], [0], [1], [0, 0, 1, 1], [], []>} : vector<16x72xf32>, vector<72x768xf32>, vector<16x768xf32> -> vector<16x768xf32>
    %c0_69 = arith.constant 0 : index
    %c0_70 = arith.constant 0 : index
    %140 = vector.load %arg7[%c0_69, %c0_70] : memref<16x768xf32, #tpu.memory_space<vmem>>, vector<16x768xf32>
    tpu.vector_store %arg7[%c0_69, %c0_70], %139 {strides = array<i32>} : memref<16x768xf32, #tpu.memory_space<vmem>>, vector<16x768xf32>,
    return
  }
}

</mosaic_0001>

<llo_original>
// kernel: tpu_custom_call.1
$region0: #{tpu_custom_call.1}
  #allocation0 [shape = 'u32[]', space=smem, size = 0x4, offset = 0x4, fixed_abs, tag = 'smem constant byte address 0x4 - core index']
  #allocation1 [shape = 'u32[144,128]{1,0:T(1,128)}', space=vmem, size = 0x12000, scoped, tag = 'internal scratch']
  #allocation2 [shape = 'f32[72,768]{1,0:T(8,128)}', space=vmem, size = 0x36000, scoped, tag = 'scratch operand']
  %s0 = inlined_call_operand.vmem [shape: f32[16,1], index: 0, kind: input, shape index: {}]
  %s1 = inlined_call_operand.vmem [shape: f32[16,1], index: 1, kind: input, shape index: {}]
  %s2 = inlined_call_operand.vmem [shape: f32[1,72], index: 2, kind: input, shape index: {}]
  %s3 = inlined_call_operand.vmem [shape: f32[1,72], index: 3, kind: input, shape index: {}]
  %s4 = inlined_call_operand.vmem [shape: f32[1,72], index: 4, kind: input, shape index: {}]
  %s5 = inlined_call_operand.vmem [shape: f32[1,72], index: 5, kind: input, shape index: {}]
  %s6 = inlined_call_operand.vmem [shape: f32[2,512], index: 6, kind: input, shape index: {}]
  %s7 = inlined_call_operand.hbm [shape: f32[16,768], index: 7, kind: output, shape index: {}]
  %s8 = sld [smem:[#allocation0]]
  $region38: #{tpu_custom_call.1} parent=0
    _
  %s10 = ssub.s32 1, %s8
  %s11 = scalar_select 0, %s10, %s8
  $region1: #{tpu_custom_call.1} parent=0
    #allocation3 [shape = 'u8[49152]{0}', space=vmem, size = 0xc000, scoped, tag = 'output window, operand 0, single buffered']
    #allocation4 [shape = 's32[1]{0}', space=sflag, size = 0x4, scoped, tag = 'scoped memory for tpu_custom_call.1']
    %12 = vsyncpa [#allocation4], 0
    // Predicated region
    $region2: #{tpu_custom_call.1} parent=1 // pred_check
      _
    $region3: #{tpu_custom_call.1} parent=1 // pred_check_branch
      %14 = sbr.rel (0) target = $region5
    $region4: #{tpu_custom_call.1} parent=1 // pred_region
      _
    $region5: #{tpu_custom_call.1} parent=1 // pred_fallthru
      _
    // Predicated region
    $region6: #{tpu_custom_call.1} parent=1 // pred_check
      _
    $region7: #{tpu_custom_call.1} parent=1 // pred_check_branch
      %16 = sbr.rel (0) target = $region9
    $region8: #{tpu_custom_call.1} parent=1 // pred_region
      _
    $region9: #{tpu_custom_call.1} parent=1 // pred_fallthru
      _
    // Predicated region
    $region10: #{tpu_custom_call.1} parent=1 // pred_check
      _
    $region11: #{tpu_custom_call.1} parent=1 // pred_check_branch
      %18 = sbr.rel (0) target = $region13
    $region12: #{tpu_custom_call.1} parent=1 // pred_region
      _
    $region13: #{tpu_custom_call.1} parent=1 // pred_fallthru
      _
    // Predicated region
    $region14: #{tpu_custom_call.1} parent=1 // pred_check
      _
    $region15: #{tpu_custom_call.1} parent=1 // pred_check_branch
      %20 = sbr.rel (0) target = $region17
    $region16: #{tpu_custom_call.1} parent=1 // pred_region
      _
    $region17: #{tpu_custom_call.1} parent=1 // pred_fallthru
      _
    // Predicated region
    $region18: #{tpu_custom_call.1} parent=1 // pred_check
      _
    $region19: #{tpu_custom_call.1} parent=1 // pred_check_branch
      %22 = sbr.rel (0) target = $region21
    $region20: #{tpu_custom_call.1} parent=1 // pred_region
      _
    $region21: #{tpu_custom_call.1} parent=1 // pred_fallthru
      _
    // Predicated region
    $region22: #{tpu_custom_call.1} parent=1 // pred_check
      _
    $region23: #{tpu_custom_call.1} parent=1 // pred_check_branch
      %24 = sbr.rel (0) target = $region25
    $region24: #{tpu_custom_call.1} parent=1 // pred_region
      _
    $region25: #{tpu_custom_call.1} parent=1 // pred_fallthru
      _
    // Predicated region
    $region26: #{tpu_custom_call.1} parent=1 // pred_check
      _
    $region27: #{tpu_custom_call.1} parent=1 // pred_check_branch
      %26 = sbr.rel (0) target = $region29
    $region28: #{tpu_custom_call.1} parent=1 // pred_region
      _
    $region29: #{tpu_custom_call.1} parent=1 // pred_fallthru
      _
    %v27 = vld [vmem:[%s0] sm:$0xff]
    %v28 = vld [vmem:[%s0 + $0x8] sm:$0xff]
    %v29 = vand.u32 2147483647, %v27
    %v30 = vand.u32 2147483647, %v28
    %v31 = vadd.f32 %v29, 0.2
    %v32 = vadd.f32 %v30, 0.2
    %v33 = vadd.f32 %v31, 13.0
    %v34 = vadd.f32 %v32, 13.0
    %v35 = vld [vmem:[%s1] sm:$0xff]
    %v36 = vld [vmem:[%s1 + $0x8] sm:$0xff]
    %v37 = vand.u32 2147483647, %v35
    %v38 = vand.u32 2147483647, %v36
    %v39 = vadd.f32 %v33, %v37
    %v40 = vadd.f32 %v34, %v38
    %v41 = vmax.f32 %v39, 0.2
    %v42 = vmax.f32 %v40, 0.2
    %v43 = vmin.f32 %v41, 8000.0
    %v44 = vmin.f32 %v42, 8000.0
    %v45 = vsub.f32 %v43, %v31
    %v46 = vsub.f32 %v44, %v32
    %v47 = vld [vmem:[%s2] sm:$0x1]
    %49 = vset.pattern.permute.xlu0 0
    %50 = vperm.xlu0 %49, %v43
    %v51 = vpop.permute.xlu0 %50
    %54 = vset.pattern.permute.xlu0 0
    %55 = vperm.xlu0 %54, %v44
    %v56 = vpop.permute.xlu0 %55
    %v59 = vlaneseq
    %v60 = vshrl.u32 %v59, 7
    %v61 = vsub.s32 0, %v60
    %v62 = vrot.slane %v47, %v61
    %v64 = vmul.f32 %v51, %v62
    %v65 = vmul.f32 %v56, %v62
    %v66 = vand.u32 2147483647, %v64
    %vm67 = vcmp.le.f32.partialorder %v66, 0.7853982
    %vm68 = vcmp.lt.s32.totalorder %v64, 0
    %v69 = vand.u32 %v64, 2139095040
    %v70 = vshrl.u32 %v69, 23
    %v71 = vsub.s32 %v70, 127
    %v72 = vand.u32 2147483647, %v64
    %v73 = vand.u32 %v72, 8388607
    %v74 = vor.u32 %v73, 8388608
    %v75 = vsub.s32 0, %v74
    %v76 = vadd.s32 %v71, 1
    %vm77 = vcmp.gt.s32.totalorder %v76, 0
    %v78 = vsel %vm77, %v76, 0
    %v79 = vshrl.u32 %v78, 5
    %v80 = vand.u32 %v78, 31
    %v81 = vsub.s32 32, %v80
    %v82 = vshrl.u32 683565275, %v81
    %v83 = vshll.u32 683565275, %v80
    %v84 = vshrl.u32 2475754826, %v81
    %v85 = vor.u32 %v83, %v84
    %v86 = vshll.u32 2475754826, %v80
    %v87 = vshrl.u32 2131351028, %v81
    %v88 = vor.u32 %v86, %v87
    %v89 = vshll.u32 2131351028, %v80
    %v90 = vshrl.u32 2102212464, %v81
    %v91 = vor.u32 %v89, %v90
    %v92 = vshll.u32 2102212464, %v80
    %v93 = vshrl.u32 920167782, %v81
    %v94 = vor.u32 %v92, %v93
    %v95 = vshll.u32 920167782, %v80
    %v96 = vshrl.u32 1326507024, %v81
    %v97 = vor.u32 %v95, %v96
    %vm98 = vcmp.lt.s32.totalorder %v79, 1
    %vm99 = vcmp.lt.s32.totalorder %v79, 2
    %vm100 = vcmp.lt.s32.totalorder %v79, 3
    %vm101 = vcmp.lt.s32.totalorder %v79, 4
    %v102 = vsel %vm98, %v82, %v85
    %v103 = vsel %vm101, %v91, 2102212464
    %v104 = vsel %vm100, %v88, %v103
    %v105 = vsel %vm99, %v102, %v104
    %v106 = vsel %vm98, %v85, %v88
    %v107 = vsel %vm101, %v94, 920167782
    %v108 = vsel %vm100, %v91, %v107
    %v109 = vsel %vm99, %v106, %v108
    %v110 = vsel %vm98, %v88, %v91
    %v111 = vsel %vm101, %v97, 1326507024
    %v112 = vsel %vm100, %v94, %v111
    %v113 = vsel %vm99, %v110, %v112
    %v114 = vshll.u32 %v74, 8
    %v115 = vmul.u32.u64.compose %v114, %v113
    %v116 = vextract.low.u32 %v115
    %v117 = vextract.high.u32 %v115
    %v118 = vmul.u32.u64.compose %v114, %v109
    %v119 = vextract.low.u32 %v118
    %v120 = vextract.high.u32 %v118
    %v121 = vmul.u32 %v114, %v105
    %v122 = vadd.s32 %v117, %v119
    %vm123 = vc.u32 %v117, %v119
    %v124 = vadd.s32 %v120, 1
    %v125 = vsel %vm123, %v124, %v120
    %v126 = vadd.s32 %v121, %v125
    %v127 = vadd.s32 %v126, 536870912
    %v128 = vshrl.u32 %v127, 30
    %v129 = vshll.u32 %v128, 30
    %v130 = vsub.s32 %v126, %v129
    %vm131 = vcmp.lt.s32.totalorder %v130, 0
    %v132 = vsub.s32 0, %v130
    %v133 = vsel %vm131, %v132, %v130
    %v134 = vclz %v133
    %v135 = vsub.s32 %v134, 2
    %vm136 = vcmp.gt.s32.totalorder 0, %v135
    %v137 = vsel %vm136, 0, %v135
    %v138 = vsub.s32 32, %v137
    %v139 = vshll.u32 %v130, %v137
    %v140 = vshrl.u32 %v122, %v138
    %v141 = vor.u32 %v139, %v140
    %v142 = vsub.s32 4294967266, %v137
    %v143 = vadd.s32 %v142, 127
    %v144 = vshll.u32 %v143, 23
    %v145 = vor.u32 4788187, %v144
    %v146 = vand.u32 2147483647, %v145
    %v148 = vcvt.s32.f32 %v141
    %v149 = vmul.f32 %v148, %v146
    %v150 = vxor.u32 %v149, 2147483648
    %v151 = vsel %vm68, %v150, %v149
    %v152 = vsub.s32 4, %v128
    %v153 = vsel %vm68, %v152, %v128
    %v154 = vsel %vm67, %v64, %v151
    %v155 = vsel %vm67, 0, %v153
    %v156 = vcosq.f32.pop %v154
    %v157 = vsinq.f32.pop %v154
    %vm158 = vweird.f32 %v64
    %v159 = vadd.s32 %v155, 3
    %v160 = vand.u32 %v159, 3
    %vm161 = vcmp.lt.s32.totalorder %v160, 2
    %vm162 = vcmp.eq.s32.totalorder %v160, 0
    %v163 = vxor.u32 %v157, 2147483648
    %v164 = vsel %vm162, %v156, %v163
    %vm165 = vcmp.eq.s32.totalorder %v160, 2
    %v166 = vxor.u32 %v156, 2147483648
    %v167 = vsel %vm165, %v166, %v157
    %v168 = vsel %vm161, %v164, %v167
    %v169 = vsel %vm158, nan, %v168
    %v170 = vand.u32 2147483647, %v65
    %vm171 = vcmp.le.f32.partialorder %v170, 0.7853982
    %vm172 = vcmp.lt.s32.totalorder %v65, 0
    %v173 = vand.u32 %v65, 2139095040
    %v174 = vshrl.u32 %v173, 23
    %v175 = vsub.s32 %v174, 127
    %v176 = vand.u32 2147483647, %v65
    %v177 = vand.u32 %v176, 8388607
    %v178 = vor.u32 %v177, 8388608
    %v179 = vsub.s32 0, %v178
    %v180 = vadd.s32 %v175, 1
    %vm181 = vcmp.gt.s32.totalorder %v180, 0
    %v182 = vsel %vm181, %v180, 0
    %v183 = vshrl.u32 %v182, 5
    %v184 = vand.u32 %v182, 31
    %v185 = vsub.s32 32, %v184
    %v186 = vshrl.u32 683565275, %v185
    %v187 = vshll.u32 683565275, %v184
    %v188 = vshrl.u32 2475754826, %v185
    %v189 = vor.u32 %v187, %v188
    %v190 = vshll.u32 2475754826, %v184
    %v191 = vshrl.u32 2131351028, %v185
    %v192 = vor.u32 %v190, %v191
    %v193 = vshll.u32 2131351028, %v184
    %v194 = vshrl.u32 2102212464, %v185
    %v195 = vor.u32 %v193, %v194
    %v196 = vshll.u32 2102212464, %v184
    %v197 = vshrl.u32 920167782, %v185
    %v198 = vor.u32 %v196, %v197
    %v199 = vshll.u32 920167782, %v184
    %v200 = vshrl.u32 1326507024, %v185
    %v201 = vor.u32 %v199, %v200
    %vm202 = vcmp.lt.s32.totalorder %v183, 1
    %vm203 = vcmp.lt.s32.totalorder %v183, 2
    %vm204 = vcmp.lt.s32.totalorder %v183, 3
    %vm205 = vcmp.lt.s32.totalorder %v183, 4
    %v206 = vsel %vm202, %v186, %v189
    %v207 = vsel %vm205, %v195, 2102212464
    %v208 = vsel %vm204, %v192, %v207
    %v209 = vsel %vm203, %v206, %v208
    %v210 = vsel %vm202, %v189, %v192
    %v211 = vsel %vm205, %v198, 920167782
    %v212 = vsel %vm204, %v195, %v211
    %v213 = vsel %vm203, %v210, %v212
    %v214 = vsel %vm202, %v192, %v195
    %v215 = vsel %vm205, %v201, 1326507024
    %v216 = vsel %vm204, %v198, %v215
    %v217 = vsel %vm203, %v214, %v216
    %v218 = vshll.u32 %v178, 8
    %v219 = vmul.u32.u64.compose %v218, %v217
    %v220 = vextract.low.u32 %v219
    %v221 = vextract.high.u32 %v219
    %v222 = vmul.u32.u64.compose %v218, %v213
    %v223 = vextract.low.u32 %v222
    %v224 = vextract.high.u32 %v222
    %v225 = vmul.u32 %v218, %v209
    %v226 = vadd.s32 %v221, %v223
    %vm227 = vc.u32 %v221, %v223
    %v228 = vadd.s32 %v224, 1
    %v229 = vsel %vm227, %v228, %v224
    %v230 = vadd.s32 %v225, %v229
    %v231 = vadd.s32 %v230, 536870912
    %v232 = vshrl.u32 %v231, 30
    %v233 = vshll.u32 %v232, 30
    %v234 = vsub.s32 %v230, %v233
    %vm235 = vcmp.lt.s32.totalorder %v234, 0
    %v236 = vsub.s32 0, %v234
    %v237 = vsel %vm235, %v236, %v234
    %v238 = vclz %v237
    %v239 = vsub.s32 %v238, 2
    %vm240 = vcmp.gt.s32.totalorder 0, %v239
    %v241 = vsel %vm240, 0, %v239
    %v242 = vsub.s32 32, %v241
    %v243 = vshll.u32 %v234, %v241
    %v244 = vshrl.u32 %v226, %v242
    %v245 = vor.u32 %v243, %v244
    %v246 = vsub.s32 4294967266, %v241
    %v247 = vadd.s32 %v246, 127
    %v248 = vshll.u32 %v247, 23
    %v249 = vor.u32 4788187, %v248
    %v250 = vand.u32 2147483647, %v249
    %v252 = vcvt.s32.f32 %v245
    %v253 = vmul.f32 %v252, %v250
    %v254 = vxor.u32 %v253, 2147483648
    %v255 = vsel %vm172, %v254, %v253
    %v256 = vsub.s32 4, %v232
    %v257 = vsel %vm172, %v256, %v232
    %v258 = vsel %vm171, %v65, %v255
    %v259 = vsel %vm171, 0, %v257
    %v260 = vcosq.f32.pop %v258
    %v261 = vsinq.f32.pop %v258
    %vm262 = vweird.f32 %v65
    %v263 = vadd.s32 %v259, 3
    %v264 = vand.u32 %v263, 3
    %vm265 = vcmp.lt.s32.totalorder %v264, 2
    %vm266 = vcmp.eq.s32.totalorder %v264, 0
    %v267 = vxor.u32 %v261, 2147483648
    %v268 = vsel %vm266, %v260, %v267
    %vm269 = vcmp.eq.s32.totalorder %v264, 2
    %v270 = vxor.u32 %v260, 2147483648
    %v271 = vsel %vm269, %v270, %v261
    %v272 = vsel %vm265, %v268, %v271
    %v273 = vsel %vm262, nan, %v272
    %275 = vset.pattern.permute.xlu0 0
    %276 = vperm.xlu0 %275, %v31
    %v277 = vpop.permute.xlu0 %276
    %280 = vset.pattern.permute.xlu0 0
    %281 = vperm.xlu0 %280, %v32
    %v282 = vpop.permute.xlu0 %281
    %v284 = vmul.f32 %v277, %v62
    %v285 = vmul.f32 %v282, %v62
    %v286 = vand.u32 2147483647, %v284
    %vm287 = vcmp.le.f32.partialorder %v286, 0.7853982
    %vm288 = vcmp.lt.s32.totalorder %v284, 0
    %v289 = vand.u32 %v284, 2139095040
    %v290 = vshrl.u32 %v289, 23
    %v291 = vsub.s32 %v290, 127
    %v292 = vand.u32 2147483647, %v284
    %v293 = vand.u32 %v292, 8388607
    %v294 = vor.u32 %v293, 8388608
    %v295 = vsub.s32 0, %v294
    %v296 = vadd.s32 %v291, 1
    %vm297 = vcmp.gt.s32.totalorder %v296, 0
    %v298 = vsel %vm297, %v296, 0
    %v299 = vshrl.u32 %v298, 5
    %v300 = vand.u32 %v298, 31
    %v301 = vsub.s32 32, %v300
    %v302 = vshrl.u32 683565275, %v301
    %v303 = vshll.u32 683565275, %v300
    %v304 = vshrl.u32 2475754826, %v301
    %v305 = vor.u32 %v303, %v304
    %v306 = vshll.u32 2475754826, %v300
    %v307 = vshrl.u32 2131351028, %v301
    %v308 = vor.u32 %v306, %v307
    %v309 = vshll.u32 2131351028, %v300
    %v310 = vshrl.u32 2102212464, %v301
    %v311 = vor.u32 %v309, %v310
    %v312 = vshll.u32 2102212464, %v300
    %v313 = vshrl.u32 920167782, %v301
    %v314 = vor.u32 %v312, %v313
    %v315 = vshll.u32 920167782, %v300
    %v316 = vshrl.u32 1326507024, %v301
    %v317 = vor.u32 %v315, %v316
    %vm318 = vcmp.lt.s32.totalorder %v299, 1
    %vm319 = vcmp.lt.s32.totalorder %v299, 2
    %vm320 = vcmp.lt.s32.totalorder %v299, 3
    %vm321 = vcmp.lt.s32.totalorder %v299, 4
    %v322 = vsel %vm318, %v302, %v305
    %v323 = vsel %vm321, %v311, 2102212464
    %v324 = vsel %vm320, %v308, %v323
    %v325 = vsel %vm319, %v322, %v324
    %v326 = vsel %vm318, %v305, %v308
    %v327 = vsel %vm321, %v314, 920167782
    %v328 = vsel %vm320, %v311, %v327
    %v329 = vsel %vm319, %v326, %v328
    %v330 = vsel %vm318, %v308, %v311
    %v331 = vsel %vm321, %v317, 1326507024
    %v332 = vsel %vm320, %v314, %v331
    %v333 = vsel %vm319, %v330, %v332
    %v334 = vshll.u32 %v294, 8
    %v335 = vmul.u32.u64.compose %v334, %v333
    %v336 = vextract.low.u32 %v335
    %v337 = vextract.high.u32 %v335
    %v338 = vmul.u32.u64.compose %v334, %v329
    %v339 = vextract.low.u32 %v338
    %v340 = vextract.high.u32 %v338
    %v341 = vmul.u32 %v334, %v325
    %v342 = vadd.s32 %v337, %v339
    %vm343 = vc.u32 %v337, %v339
    %v344 = vadd.s32 %v340, 1
    %v345 = vsel %vm343, %v344, %v340
    %v346 = vadd.s32 %v341, %v345
    %v347 = vadd.s32 %v346, 536870912
    %v348 = vshrl.u32 %v347, 30
    %v349 = vshll.u32 %v348, 30
    %v350 = vsub.s32 %v346, %v349
    %vm351 = vcmp.lt.s32.totalorder %v350, 0
    %v352 = vsub.s32 0, %v350
    %v353 = vsel %vm351, %v352, %v350
    %v354 = vclz %v353
    %v355 = vsub.s32 %v354, 2
    %vm356 = vcmp.gt.s32.totalorder 0, %v355
    %v357 = vsel %vm356, 0, %v355
    %v358 = vsub.s32 32, %v357
    %v359 = vshll.u32 %v350, %v357
    %v360 = vshrl.u32 %v342, %v358
    %v361 = vor.u32 %v359, %v360
    %v362 = vsub.s32 4294967266, %v357
    %v363 = vadd.s32 %v362, 127
    %v364 = vshll.u32 %v363, 23
    %v365 = vor.u32 4788187, %v364
    %v366 = vand.u32 2147483647, %v365
    %v368 = vcvt.s32.f32 %v361
    %v369 = vmul.f32 %v368, %v366
    %v370 = vxor.u32 %v369, 2147483648
    %v371 = vsel %vm288, %v370, %v369
    %v372 = vsub.s32 4, %v348
    %v373 = vsel %vm288, %v372, %v348
    %v374 = vsel %vm287, %v284, %v371
    %v375 = vsel %vm287, 0, %v373
    %v376 = vcosq.f32.pop %v374
    %v377 = vsinq.f32.pop %v374
    %vm378 = vweird.f32 %v284
    %v379 = vadd.s32 %v375, 3
    %v380 = vand.u32 %v379, 3
    %vm381 = vcmp.lt.s32.totalorder %v380, 2
    %vm382 = vcmp.eq.s32.totalorder %v380, 0
    %v383 = vxor.u32 %v377, 2147483648
    %v384 = vsel %vm382, %v376, %v383
    %vm385 = vcmp.eq.s32.totalorder %v380, 2
    %v386 = vxor.u32 %v376, 2147483648
    %v387 = vsel %vm385, %v386, %v377
    %v388 = vsel %vm381, %v384, %v387
    %v389 = vsel %vm378, nan, %v388
    %v390 = vand.u32 2147483647, %v285
    %vm391 = vcmp.le.f32.partialorder %v390, 0.7853982
    %vm392 = vcmp.lt.s32.totalorder %v285, 0
    %v393 = vand.u32 %v285, 2139095040
    %v394 = vshrl.u32 %v393, 23
    %v395 = vsub.s32 %v394, 127
    %v396 = vand.u32 2147483647, %v285
    %v397 = vand.u32 %v396, 8388607
    %v398 = vor.u32 %v397, 8388608
    %v399 = vsub.s32 0, %v398
    %v400 = vadd.s32 %v395, 1
    %vm401 = vcmp.gt.s32.totalorder %v400, 0
    %v402 = vsel %vm401, %v400, 0
    %v403 = vshrl.u32 %v402, 5
    %v404 = vand.u32 %v402, 31
    %v405 = vsub.s32 32, %v404
    %v406 = vshrl.u32 683565275, %v405
    %v407 = vshll.u32 683565275, %v404
    %v408 = vshrl.u32 2475754826, %v405
    %v409 = vor.u32 %v407, %v408
    %v410 = vshll.u32 2475754826, %v404
    %v411 = vshrl.u32 2131351028, %v405
    %v412 = vor.u32 %v410, %v411
    %v413 = vshll.u32 2131351028, %v404
    %v414 = vshrl.u32 2102212464, %v405
    %v415 = vor.u32 %v413, %v414
    %v416 = vshll.u32 2102212464, %v404
    %v417 = vshrl.u32 920167782, %v405
    %v418 = vor.u32 %v416, %v417
    %v419 = vshll.u32 920167782, %v404
    %v420 = vshrl.u32 1326507024, %v405
    %v421 = vor.u32 %v419, %v420
    %vm422 = vcmp.lt.s32.totalorder %v403, 1
    %vm423 = vcmp.lt.s32.totalorder %v403, 2
    %vm424 = vcmp.lt.s32.totalorder %v403, 3
    %vm425 = vcmp.lt.s32.totalorder %v403, 4
    %v426 = vsel %vm422, %v406, %v409
    %v427 = vsel %vm425, %v415, 2102212464
    %v428 = vsel %vm424, %v412, %v427
    %v429 = vsel %vm423, %v426, %v428
    %v430 = vsel %vm422, %v409, %v412
    %v431 = vsel %vm425, %v418, 920167782
    %v432 = vsel %vm424, %v415, %v431
    %v433 = vsel %vm423, %v430, %v432
    %v434 = vsel %vm422, %v412, %v415
    %v435 = vsel %vm425, %v421, 1326507024
    %v436 = vsel %vm424, %v418, %v435
    %v437 = vsel %vm423, %v434, %v436
    %v438 = vshll.u32 %v398, 8
    %v439 = vmul.u32.u64.compose %v438, %v437
    %v440 = vextract.low.u32 %v439
    %v441 = vextract.high.u32 %v439
    %v442 = vmul.u32.u64.compose %v438, %v433
    %v443 = vextract.low.u32 %v442
    %v444 = vextract.high.u32 %v442
    %v445 = vmul.u32 %v438, %v429
    %v446 = vadd.s32 %v441, %v443
    %vm447 = vc.u32 %v441, %v443
    %v448 = vadd.s32 %v444, 1
    %v449 = vsel %vm447, %v448, %v444
    %v450 = vadd.s32 %v445, %v449
    %v451 = vadd.s32 %v450, 536870912
    %v452 = vshrl.u32 %v451, 30
    %v453 = vshll.u32 %v452, 30
    %v454 = vsub.s32 %v450, %v453
    %vm455 = vcmp.lt.s32.totalorder %v454, 0
    %v456 = vsub.s32 0, %v454
    %v457 = vsel %vm455, %v456, %v454
    %v458 = vclz %v457
    %v459 = vsub.s32 %v458, 2
    %vm460 = vcmp.gt.s32.totalorder 0, %v459
    %v461 = vsel %vm460, 0, %v459
    %v462 = vsub.s32 32, %v461
    %v463 = vshll.u32 %v454, %v461
    %v464 = vshrl.u32 %v446, %v462
    %v465 = vor.u32 %v463, %v464
    %v466 = vsub.s32 4294967266, %v461
    %v467 = vadd.s32 %v466, 127
    %v468 = vshll.u32 %v467, 23
    %v469 = vor.u32 4788187, %v468
    %v470 = vand.u32 2147483647, %v469
    %v472 = vcvt.s32.f32 %v465
    %v473 = vmul.f32 %v472, %v470
    %v474 = vxor.u32 %v473, 2147483648
    %v475 = vsel %vm392, %v474, %v473
    %v476 = vsub.s32 4, %v452
    %v477 = vsel %vm392, %v476, %v452
    %v478 = vsel %vm391, %v285, %v475
    %v479 = vsel %vm391, 0, %v477
    %v480 = vcosq.f32.pop %v478
    %v481 = vsinq.f32.pop %v478
    %vm482 = vweird.f32 %v285
    %v483 = vadd.s32 %v479, 3
    %v484 = vand.u32 %v483, 3
    %vm485 = vcmp.lt.s32.totalorder %v484, 2
    %vm486 = vcmp.eq.s32.totalorder %v484, 0
    %v487 = vxor.u32 %v481, 2147483648
    %v488 = vsel %vm486, %v480, %v487
    %vm489 = vcmp.eq.s32.totalorder %v484, 2
    %v490 = vxor.u32 %v480, 2147483648
    %v491 = vsel %vm489, %v490, %v481
    %v492 = vsel %vm485, %v488, %v491
    %v493 = vsel %vm482, nan, %v492
    %v494 = vsub.f32 %v169, %v389
    %v495 = vsub.f32 %v273, %v493
    %v496 = vld [vmem:[%s3] sm:$0x1]
    %v498 = vlaneseq
    %v499 = vshrl.u32 %v498, 7
    %v500 = vsub.s32 0, %v499
    %v501 = vrot.slane %v496, %v500
    %v503 = vmul.f32 %v494, %v501
    %v504 = vmul.f32 %v495, %v501
    %v505 = vld [vmem:[%s4] sm:$0x1]
    %v507 = vlaneseq
    %v508 = vshrl.u32 %v507, 7
    %v509 = vsub.s32 0, %v508
    %v510 = vrot.slane %v505, %v509
    %v512 = vmul.f32 %v503, %v510
    %v513 = vmul.f32 %v504, %v510
    %v514 = vld [vmem:[%s5] sm:$0x1]
    %v515 = vmul.f32 %v45, 2.0
    %v516 = vmul.f32 %v46, 2.0
    %v518 = vlaneseq
    %v519 = vshrl.u32 %v518, 7
    %v520 = vsub.s32 0, %v519
    %v521 = vrot.slane %v514, %v520
    %524 = vset.pattern.permute.xlu0 0
    %525 = vperm.xlu0 %524, %v515
    %v526 = vpop.permute.xlu0 %525
    %529 = vset.pattern.permute.xlu0 0
    %530 = vperm.xlu0 %529, %v516
    %v531 = vpop.permute.xlu0 %530
    %v533 = vmul.f32 %v521, %v526
    %v534 = vmul.f32 %v521, %v531
    %v535 = vadd.f32 %v512, %v533
    %v536 = vadd.f32 %v513, %v534
    %v537 = vrcp.pop %v515
    %v538 = vmul.f32 1.0, %v537
    %v539 = vrcp.pop %v516
    %v540 = vmul.f32 1.0, %v539
    %542 = vset.pattern.permute.xlu0 0
    %543 = vperm.xlu0 %542, %v538
    %v544 = vpop.permute.xlu0 %543
    %547 = vset.pattern.permute.xlu0 0
    %548 = vperm.xlu0 %547, %v540
    %v549 = vpop.permute.xlu0 %548
    %v551 = vmul.f32 %v535, %v544
    %v552 = vmul.f32 %v536, %v549
    %v553 = vlaneseq
    %v554 = vshrl.u32 %v553, 7
    %v555 = vld [vmem:[%s6] ss:$2 sm:$0xf]
    %v557 = vlaneseq
    %v558 = vshrl.u32 %v557, 7
    %v559 = vsub.s32 0, %v558
    %v560 = vrot.slane %v555, %v559
    %v561 = vlaneseq
    %v562 = vshrl.u32 %v561, 7
    %v563 = vsub.s32 1, %v562
    %v564 = vrot.slane %v555, %v563
    %v565 = vlaneseq
    %v566 = vshrl.u32 %v565, 7
    %v567 = vsub.s32 2, %v566
    %v568 = vrot.slane %v555, %v567
    %v569 = vlaneseq
    %v570 = vshrl.u32 %v569, 7
    %v571 = vsub.s32 3, %v570
    %v572 = vrot.slane %v555, %v571
    %577 = vrot.lane.b32.xlu0 %v560, 127
    %v578 = vpop.permute.xlu0 %577
    %579 = vrot.lane.b32.xlu0 %v564, 127
    %v580 = vpop.permute.xlu0 %579
    %581 = vrot.lane.b32.xlu0 %v568, 127
    %v582 = vpop.permute.xlu0 %581
    %583 = vrot.lane.b32.xlu0 %v572, 127
    %v584 = vpop.permute.xlu0 %583
    %v585 = vlaneseq
    %v586 = vand.u32 %v585, 127
    %vm587 = vcmp.lt.s32.totalorder %v586, 127
    %v588 = vsel %vm587, %v582, %v584
    %v589 = vsel %vm587, %v580, %v582
    %v590 = vsel %vm587, %v578, %v580
    %v591 = vsel %vm587, %v584, %v578
    %v592 = vand.u32 %v554, 1
    %vm593 = vcmp.ne.s32.totalorder %v592, 0
    %v594 = vsel %vm593, %v590, %v560
    %v595 = vsel %vm593, %v589, %v564
    %v596 = vsel %vm593, %v588, %v568
    %v597 = vsel %vm593, %v591, %v572
    %598 = vrot.lane.b32.xlu0 %v594, 126
    %v599 = vpop.permute.xlu0 %598
    %600 = vrot.lane.b32.xlu0 %v595, 126
    %v601 = vpop.permute.xlu0 %600
    %602 = vrot.lane.b32.xlu0 %v596, 126
    %v603 = vpop.permute.xlu0 %602
    %604 = vrot.lane.b32.xlu0 %v597, 126
    %v605 = vpop.permute.xlu0 %604
    %vm606 = vcmp.lt.s32.totalorder %v586, 126
    %v607 = vsel %vm606, %v603, %v605
    %v608 = vsel %vm606, %v601, %v603
    %v609 = vsel %vm606, %v599, %v601
    %v610 = vsel %vm606, %v605, %v599
    %v611 = vand.u32 %v554, 2
    %vm612 = vcmp.ne.s32.totalorder %v611, 0
    %v613 = vsel %vm612, %v609, %v594
    %v614 = vsel %vm612, %v608, %v595
    %v615 = vsel %vm612, %v607, %v596
    %v616 = vsel %vm612, %v610, %v597
    %617 = vrot.lane.b32.xlu0 %v613, 124
    %v618 = vpop.permute.xlu0 %617
    %619 = vrot.lane.b32.xlu0 %v614, 124
    %v620 = vpop.permute.xlu0 %619
    %621 = vrot.lane.b32.xlu0 %v615, 124
    %v622 = vpop.permute.xlu0 %621
    %623 = vrot.lane.b32.xlu0 %v616, 124
    %v624 = vpop.permute.xlu0 %623
    %vm625 = vcmp.lt.s32.totalorder %v586, 124
    %v626 = vsel %vm625, %v622, %v624
    %v627 = vsel %vm625, %v620, %v622
    %v628 = vsel %vm625, %v618, %v620
    %v629 = vsel %vm625, %v624, %v618
    %v630 = vand.u32 %v554, 4
    %vm631 = vcmp.ne.s32.totalorder %v630, 0
    %v632 = vsel %vm631, %v628, %v613
    %v633 = vsel %vm631, %v627, %v614
    %v634 = vsel %vm631, %v626, %v615
    %v635 = vsel %vm631, %v629, %v616
    %636 = vst [vmem:[#allocation2] sm:$0xff] %v632
    %637 = vst [vmem:[#allocation2 + $0x8] sm:$0xff] %v633
    %638 = vst [vmem:[#allocation2 + $0x10] sm:$0xff] %v634
    %639 = vrot.lane.b32.xlu0 %v632, 120
    %v640 = vpop.permute.xlu0 %639
    %641 = vrot.lane.b32.xlu0 %v633, 120
    %v642 = vpop.permute.xlu0 %641
    %643 = vrot.lane.b32.xlu0 %v634, 120
    %v644 = vpop.permute.xlu0 %643
    %645 = vrot.lane.b32.xlu0 %v635, 120
    %v646 = vpop.permute.xlu0 %645
    %vm647 = vcmp.lt.s32.totalorder %v586, 120
    %v648 = vsel %vm647, %v644, %v646
    %v649 = vsel %vm647, %v642, %v644
    %v650 = vsel %vm647, %v640, %v642
    %651 = vst [vmem:[#allocation2 + $0x30] sm:$0xff] %v650
    %652 = vst [vmem:[#allocation2 + $0x38] sm:$0xff] %v649
    %653 = vst [vmem:[#allocation2 + $0x40] sm:$0xff] %v648
    %654 = vrot.lane.b32.xlu0 %v632, 112
    %v655 = vpop.permute.xlu0 %654
    %656 = vrot.lane.b32.xlu0 %v633, 112
    %v657 = vpop.permute.xlu0 %656
    %658 = vrot.lane.b32.xlu0 %v634, 112
    %v659 = vpop.permute.xlu0 %658
    %660 = vrot.lane.b32.xlu0 %v635, 112
    %v661 = vpop.permute.xlu0 %660
    %vm662 = vcmp.lt.s32.totalorder %v586, 112
    %v663 = vsel %vm662, %v659, %v661
    %v664 = vsel %vm662, %v657, %v659
    %v665 = vsel %vm662, %v655, %v657
    %666 = vst [vmem:[#allocation2 + $0x60] sm:$0xff] %v665
    %667 = vst [vmem:[#allocation2 + $0x68] sm:$0xff] %v664
    %668 = vst [vmem:[#allocation2 + $0x70] sm:$0xff] %v663
    %669 = vrot.lane.b32.xlu0 %v632, 104
    %v670 = vpop.permute.xlu0 %669
    %671 = vrot.lane.b32.xlu0 %v633, 104
    %v672 = vpop.permute.xlu0 %671
    %673 = vrot.lane.b32.xlu0 %v634, 104
    %v674 = vpop.permute.xlu0 %673
    %675 = vrot.lane.b32.xlu0 %v635, 104
    %v676 = vpop.permute.xlu0 %675
    %vm677 = vcmp.lt.s32.totalorder %v586, 104
    %v678 = vsel %vm677, %v674, %v676
    %v679 = vsel %vm677, %v672, %v674
    %v680 = vsel %vm677, %v670, %v672
    %681 = vst [vmem:[#allocation2 + $0x90] sm:$0xff] %v680
    %682 = vst [vmem:[#allocation2 + $0x98] sm:$0xff] %v679
    %683 = vst [vmem:[#allocation2 + $0xa0] sm:$0xff] %v678
    %684 = vrot.lane.b32.xlu0 %v632, 96
    %v685 = vpop.permute.xlu0 %684
    %686 = vrot.lane.b32.xlu0 %v633, 96
    %v687 = vpop.permute.xlu0 %686
    %688 = vrot.lane.b32.xlu0 %v634, 96
    %v689 = vpop.permute.xlu0 %688
    %690 = vrot.lane.b32.xlu0 %v635, 96
    %v691 = vpop.permute.xlu0 %690
    %vm692 = vcmp.lt.s32.totalorder %v586, 96
    %v693 = vsel %vm692, %v689, %v691
    %v694 = vsel %vm692, %v687, %v689
    %v695 = vsel %vm692, %v685, %v687
    %696 = vst [vmem:[#allocation2 + $0xc0] sm:$0xff] %v695
    %697 = vst [vmem:[#allocation2 + $0xc8] sm:$0xff] %v694
    %698 = vst [vmem:[#allocation2 + $0xd0] sm:$0xff] %v693
    %699 = vrot.lane.b32.xlu0 %v632, 88
    %v700 = vpop.permute.xlu0 %699
    %701 = vrot.lane.b32.xlu0 %v633, 88
    %v702 = vpop.permute.xlu0 %701
    %703 = vrot.lane.b32.xlu0 %v634, 88
    %v704 = vpop.permute.xlu0 %703
    %705 = vrot.lane.b32.xlu0 %v635, 88
    %v706 = vpop.permute.xlu0 %705
    %vm707 = vcmp.lt.s32.totalorder %v586, 88
    %v708 = vsel %vm707, %v704, %v706
    %v709 = vsel %vm707, %v702, %v704
    %v710 = vsel %vm707, %v700, %v702
    %711 = vst [vmem:[#allocation2 + $0xf0] sm:$0xff] %v710
    %712 = vst [vmem:[#allocation2 + $0xf8] sm:$0xff] %v709
    %713 = vst [vmem:[#allocation2 + $0x100] sm:$0xff] %v708
    %714 = vrot.lane.b32.xlu0 %v632, 80
    %v715 = vpop.permute.xlu0 %714
    %716 = vrot.lane.b32.xlu0 %v633, 80
    %v717 = vpop.permute.xlu0 %716
    %718 = vrot.lane.b32.xlu0 %v634, 80
    %v719 = vpop.permute.xlu0 %718
    %720 = vrot.lane.b32.xlu0 %v635, 80
    %v721 = vpop.permute.xlu0 %720
    %vm722 = vcmp.lt.s32.totalorder %v586, 80
    %v723 = vsel %vm722, %v719, %v721
    %v724 = vsel %vm722, %v717, %v719
    %v725 = vsel %vm722, %v715, %v717
    %726 = vst [vmem:[#allocation2 + $0x120] sm:$0xff] %v725
    %727 = vst [vmem:[#allocation2 + $0x128] sm:$0xff] %v724
    %728 = vst [vmem:[#allocation2 + $0x130] sm:$0xff] %v723
    %729 = vrot.lane.b32.xlu0 %v632, 72
    %v730 = vpop.permute.xlu0 %729
    %731 = vrot.lane.b32.xlu0 %v633, 72
    %v732 = vpop.permute.xlu0 %731
    %733 = vrot.lane.b32.xlu0 %v634, 72
    %v734 = vpop.permute.xlu0 %733
    %735 = vrot.lane.b32.xlu0 %v635, 72
    %v736 = vpop.permute.xlu0 %735
    %vm737 = vcmp.lt.s32.totalorder %v586, 72
    %v738 = vsel %vm737, %v734, %v736
    %v739 = vsel %vm737, %v732, %v734
    %v740 = vsel %vm737, %v730, %v732
    %741 = vst [vmem:[#allocation2 + $0x150] sm:$0xff] %v740
    %742 = vst [vmem:[#allocation2 + $0x158] sm:$0xff] %v739
    %743 = vst [vmem:[#allocation2 + $0x160] sm:$0xff] %v738
    %744 = vrot.lane.b32.xlu0 %v632, 64
    %v745 = vpop.permute.xlu0 %744
    %746 = vrot.lane.b32.xlu0 %v633, 64
    %v747 = vpop.permute.xlu0 %746
    %748 = vrot.lane.b32.xlu0 %v634, 64
    %v749 = vpop.permute.xlu0 %748
    %750 = vrot.lane.b32.xlu0 %v635, 64
    %v751 = vpop.permute.xlu0 %750
    %vm752 = vcmp.lt.s32.totalorder %v586, 64
    %v753 = vsel %vm752, %v749, %v751
    %v754 = vsel %vm752, %v747, %v749
    %v755 = vsel %vm752, %v745, %v747
    %756 = vst [vmem:[#allocation2 + $0x180] sm:$0xff] %v755
    %757 = vst [vmem:[#allocation2 + $0x188] sm:$0xff] %v754
    %758 = vst [vmem:[#allocation2 + $0x190] sm:$0xff] %v753
    %s759 = scalar_lea.vmem %s6, 1
    %v760 = vld [vmem:[%s759] ss:$2 sm:$0xf]
    %v762 = vlaneseq
    %v763 = vshrl.u32 %v762, 7
    %v764 = vsub.s32 0, %v763
    %v765 = vrot.slane %v760, %v764
    %v766 = vlaneseq
    %v767 = vshrl.u32 %v766, 7
    %v768 = vsub.s32 1, %v767
    %v769 = vrot.slane %v760, %v768
    %v770 = vlaneseq
    %v771 = vshrl.u32 %v770, 7
    %v772 = vsub.s32 2, %v771
    %v773 = vrot.slane %v760, %v772
    %v774 = vlaneseq
    %v775 = vshrl.u32 %v774, 7
    %v776 = vsub.s32 3, %v775
    %v777 = vrot.slane %v760, %v776
    %782 = vrot.lane.b32.xlu0 %v765, 127
    %v783 = vpop.permute.xlu0 %782
    %784 = vrot.lane.b32.xlu0 %v769, 127
    %v785 = vpop.permute.xlu0 %784
    %786 = vrot.lane.b32.xlu0 %v773, 127
    %v787 = vpop.permute.xlu0 %786
    %788 = vrot.lane.b32.xlu0 %v777, 127
    %v789 = vpop.permute.xlu0 %788
    %v790 = vsel %vm587, %v787, %v789
    %v791 = vsel %vm587, %v785, %v787
    %v792 = vsel %vm587, %v783, %v785
    %v793 = vsel %vm587, %v789, %v783
    %v794 = vsel %vm593, %v792, %v765
    %v795 = vsel %vm593, %v791, %v769
    %v796 = vsel %vm593, %v790, %v773
    %v797 = vsel %vm593, %v793, %v777
    %798 = vrot.lane.b32.xlu0 %v794, 126
    %v799 = vpop.permute.xlu0 %798
    %800 = vrot.lane.b32.xlu0 %v795, 126
    %v801 = vpop.permute.xlu0 %800
    %802 = vrot.lane.b32.xlu0 %v796, 126
    %v803 = vpop.permute.xlu0 %802
    %804 = vrot.lane.b32.xlu0 %v797, 126
    %v805 = vpop.permute.xlu0 %804
    %v806 = vsel %vm606, %v803, %v805
    %v807 = vsel %vm606, %v801, %v803
    %v808 = vsel %vm606, %v799, %v801
    %v809 = vsel %vm606, %v805, %v799
    %v810 = vsel %vm612, %v808, %v794
    %v811 = vsel %vm612, %v807, %v795
    %v812 = vsel %vm612, %v806, %v796
    %v813 = vsel %vm612, %v809, %v797
    %814 = vrot.lane.b32.xlu0 %v810, 124
    %v815 = vpop.permute.xlu0 %814
    %816 = vrot.lane.b32.xlu0 %v811, 124
    %v817 = vpop.permute.xlu0 %816
    %818 = vrot.lane.b32.xlu0 %v812, 124
    %v819 = vpop.permute.xlu0 %818
    %820 = vrot.lane.b32.xlu0 %v813, 124
    %v821 = vpop.permute.xlu0 %820
    %v822 = vsel %vm625, %v819, %v821
    %v823 = vsel %vm625, %v817, %v819
    %v824 = vsel %vm625, %v815, %v817
    %v825 = vsel %vm625, %v821, %v815
    %v826 = vsel %vm631, %v824, %v810
    %v827 = vsel %vm631, %v823, %v811
    %v828 = vsel %vm631, %v822, %v812
    %v829 = vsel %vm631, %v825, %v813
    %830 = vst [vmem:[#allocation2 + $0x18] sm:$0xff] %v826
    %831 = vst [vmem:[#allocation2 + $0x20] sm:$0xff] %v827
    %832 = vst [vmem:[#allocation2 + $0x28] sm:$0xff] %v828
    %833 = vrot.lane.b32.xlu0 %v826, 120
    %v834 = vpop.permute.xlu0 %833
    %835 = vrot.lane.b32.xlu0 %v827, 120
    %v836 = vpop.permute.xlu0 %835
    %837 = vrot.lane.b32.xlu0 %v828, 120
    %v838 = vpop.permute.xlu0 %837
    %839 = vrot.lane.b32.xlu0 %v829, 120
    %v840 = vpop.permute.xlu0 %839
    %v841 = vsel %vm647, %v838, %v840
    %v842 = vsel %vm647, %v836, %v838
    %v843 = vsel %vm647, %v834, %v836
    %844 = vst [vmem:[#allocation2 + $0x48] sm:$0xff] %v843
    %845 = vst [vmem:[#allocation2 + $0x50] sm:$0xff] %v842
    %846 = vst [vmem:[#allocation2 + $0x58] sm:$0xff] %v841
    %847 = vrot.lane.b32.xlu0 %v826, 112
    %v848 = vpop.permute.xlu0 %847
    %849 = vrot.lane.b32.xlu0 %v827, 112
    %v850 = vpop.permute.xlu0 %849
    %851 = vrot.lane.b32.xlu0 %v828, 112
    %v852 = vpop.permute.xlu0 %851
    %853 = vrot.lane.b32.xlu0 %v829, 112
    %v854 = vpop.permute.xlu0 %853
    %v855 = vsel %vm662, %v852, %v854
    %v856 = vsel %vm662, %v850, %v852
    %v857 = vsel %vm662, %v848, %v850
    %858 = vst [vmem:[#allocation2 + $0x78] sm:$0xff] %v857
    %859 = vst [vmem:[#allocation2 + $0x80] sm:$0xff] %v856
    %860 = vst [vmem:[#allocation2 + $0x88] sm:$0xff] %v855
    %861 = vrot.lane.b32.xlu0 %v826, 104
    %v862 = vpop.permute.xlu0 %861
    %863 = vrot.lane.b32.xlu0 %v827, 104
    %v864 = vpop.permute.xlu0 %863
    %865 = vrot.lane.b32.xlu0 %v828, 104
    %v866 = vpop.permute.xlu0 %865
    %867 = vrot.lane.b32.xlu0 %v829, 104
    %v868 = vpop.permute.xlu0 %867
    %v869 = vsel %vm677, %v866, %v868
    %v870 = vsel %vm677, %v864, %v866
    %v871 = vsel %vm677, %v862, %v864
    %872 = vst [vmem:[#allocation2 + $0xa8] sm:$0xff] %v871
    %873 = vst [vmem:[#allocation2 + $0xb0] sm:$0xff] %v870
    %874 = vst [vmem:[#allocation2 + $0xb8] sm:$0xff] %v869
    %875 = vrot.lane.b32.xlu0 %v826, 96
    %v876 = vpop.permute.xlu0 %875
    %877 = vrot.lane.b32.xlu0 %v827, 96
    %v878 = vpop.permute.xlu0 %877
    %879 = vrot.lane.b32.xlu0 %v828, 96
    %v880 = vpop.permute.xlu0 %879
    %881 = vrot.lane.b32.xlu0 %v829, 96
    %v882 = vpop.permute.xlu0 %881
    %v883 = vsel %vm692, %v880, %v882
    %v884 = vsel %vm692, %v878, %v880
    %v885 = vsel %vm692, %v876, %v878
    %886 = vst [vmem:[#allocation2 + $0xd8] sm:$0xff] %v885
    %887 = vst [vmem:[#allocation2 + $0xe0] sm:$0xff] %v884
    %888 = vst [vmem:[#allocation2 + $0xe8] sm:$0xff] %v883
    %889 = vrot.lane.b32.xlu0 %v826, 88
    %v890 = vpop.permute.xlu0 %889
    %891 = vrot.lane.b32.xlu0 %v827, 88
    %v892 = vpop.permute.xlu0 %891
    %893 = vrot.lane.b32.xlu0 %v828, 88
    %v894 = vpop.permute.xlu0 %893
    %895 = vrot.lane.b32.xlu0 %v829, 88
    %v896 = vpop.permute.xlu0 %895
    %v897 = vsel %vm707, %v894, %v896
    %v898 = vsel %vm707, %v892, %v894
    %v899 = vsel %vm707, %v890, %v892
    %900 = vst [vmem:[#allocation2 + $0x108] sm:$0xff] %v899
    %901 = vst [vmem:[#allocation2 + $0x110] sm:$0xff] %v898
    %902 = vst [vmem:[#allocation2 + $0x118] sm:$0xff] %v897
    %903 = vrot.lane.b32.xlu0 %v826, 80
    %v904 = vpop.permute.xlu0 %903
    %905 = vrot.lane.b32.xlu0 %v827, 80
    %v906 = vpop.permute.xlu0 %905
    %907 = vrot.lane.b32.xlu0 %v828, 80
    %v908 = vpop.permute.xlu0 %907
    %909 = vrot.lane.b32.xlu0 %v829, 80
    %v910 = vpop.permute.xlu0 %909
    %v911 = vsel %vm722, %v908, %v910
    %v912 = vsel %vm722, %v906, %v908
    %v913 = vsel %vm722, %v904, %v906
    %914 = vst [vmem:[#allocation2 + $0x138] sm:$0xff] %v913
    %915 = vst [vmem:[#allocation2 + $0x140] sm:$0xff] %v912
    %916 = vst [vmem:[#allocation2 + $0x148] sm:$0xff] %v911
    %917 = vrot.lane.b32.xlu0 %v826, 72
    %v918 = vpop.permute.xlu0 %917
    %919 = vrot.lane.b32.xlu0 %v827, 72
    %v920 = vpop.permute.xlu0 %919
    %921 = vrot.lane.b32.xlu0 %v828, 72
    %v922 = vpop.permute.xlu0 %921
    %923 = vrot.lane.b32.xlu0 %v829, 72
    %v924 = vpop.permute.xlu0 %923
    %v925 = vsel %vm737, %v922, %v924
    %v926 = vsel %vm737, %v920, %v922
    %v927 = vsel %vm737, %v918, %v920
    %928 = vst [vmem:[#allocation2 + $0x168] sm:$0xff] %v927
    %929 = vst [vmem:[#allocation2 + $0x170] sm:$0xff] %v926
    %930 = vst [vmem:[#allocation2 + $0x178] sm:$0xff] %v925
    %931 = vrot.lane.b32.xlu0 %v826, 64
    %v932 = vpop.permute.xlu0 %931
    %933 = vrot.lane.b32.xlu0 %v827, 64
    %v934 = vpop.permute.xlu0 %933
    %935 = vrot.lane.b32.xlu0 %v828, 64
    %v936 = vpop.permute.xlu0 %935
    %937 = vrot.lane.b32.xlu0 %v829, 64
    %v938 = vpop.permute.xlu0 %937
    %v939 = vsel %vm752, %v936, %v938
    %v940 = vsel %vm752, %v934, %v936
    %v941 = vsel %vm752, %v932, %v934
    %942 = vst [vmem:[#allocation2 + $0x198] sm:$0xff] %v941
    %943 = vst [vmem:[#allocation2 + $0x1a0] sm:$0xff] %v940
    %944 = vst [vmem:[#allocation2 + $0x1a8] sm:$0xff] %v939
    %v945 = vld [vmem:[#allocation2] sm:$0xff]
    %v946 = vld [vmem:[#allocation2 + $0x8] sm:$0xff]
    %v947 = vld [vmem:[#allocation2 + $0x10] sm:$0xff]
    %v948 = vld [vmem:[#allocation2 + $0x18] sm:$0xff]
    %v949 = vld [vmem:[#allocation2 + $0x20] sm:$0xff]
    %v950 = vld [vmem:[#allocation2 + $0x28] sm:$0xff]
    %v951 = vld [vmem:[#allocation2 + $0x30] sm:$0xff]
    %v952 = vld [vmem:[#allocation2 + $0x38] sm:$0xff]
    %v953 = vld [vmem:[#allocation2 + $0x40] sm:$0xff]
    %v954 = vld [vmem:[#allocation2 + $0x48] sm:$0xff]
    %v955 = vld [vmem:[#allocation2 + $0x50] sm:$0xff]
    %v956 = vld [vmem:[#allocation2 + $0x58] sm:$0xff]
    %v957 = vld [vmem:[#allocation2 + $0x60] sm:$0xff]
    %v958 = vld [vmem:[#allocation2 + $0x68] sm:$0xff]
    %v959 = vld [vmem:[#allocation2 + $0x70] sm:$0xff]
    %v960 = vld [vmem:[#allocation2 + $0x78] sm:$0xff]
    %v961 = vld [vmem:[#allocation2 + $0x80] sm:$0xff]
    %v962 = vld [vmem:[#allocation2 + $0x88] sm:$0xff]
    %v963 = vld [vmem:[#allocation2 + $0x90] sm:$0xff]
    %v964 = vld [vmem:[#allocation2 + $0x98] sm:$0xff]
    %v965 = vld [vmem:[#allocation2 + $0xa0] sm:$0xff]
    %v966 = vld [vmem:[#allocation2 + $0xa8] sm:$0xff]
    %v967 = vld [vmem:[#allocation2 + $0xb0] sm:$0xff]
    %v968 = vld [vmem:[#allocation2 + $0xb8] sm:$0xff]
    %v969 = vld [vmem:[#allocation2 + $0xc0] sm:$0xff]
    %v970 = vld [vmem:[#allocation2 + $0xc8] sm:$0xff]
    %v971 = vld [vmem:[#allocation2 + $0xd0] sm:$0xff]
    %v972 = vld [vmem:[#allocation2 + $0xd8] sm:$0xff]
    %v973 = vld [vmem:[#allocation2 + $0xe0] sm:$0xff]
    %v974 = vld [vmem:[#allocation2 + $0xe8] sm:$0xff]
    %v975 = vld [vmem:[#allocation2 + $0xf0] sm:$0xff]
    %v976 = vld [vmem:[#allocation2 + $0xf8] sm:$0xff]
    %v977 = vld [vmem:[#allocation2 + $0x100] sm:$0xff]
    %v978 = vld [vmem:[#allocation2 + $0x108] sm:$0xff]
    %v979 = vld [vmem:[#allocation2 + $0x110] sm:$0xff]
    %v980 = vld [vmem:[#allocation2 + $0x118] sm:$0xff]
    %v981 = vld [vmem:[#allocation2 + $0x120] sm:$0xff]
    %v982 = vld [vmem:[#allocation2 + $0x128] sm:$0xff]
    %v983 = vld [vmem:[#allocation2 + $0x130] sm:$0xff]
    %v984 = vld [vmem:[#allocation2 + $0x138] sm:$0xff]
    %v985 = vld [vmem:[#allocation2 + $0x140] sm:$0xff]
    %v986 = vld [vmem:[#allocation2 + $0x148] sm:$0xff]
    %v987 = vld [vmem:[#allocation2 + $0x150] sm:$0xff]
    %v988 = vld [vmem:[#allocation2 + $0x158] sm:$0xff]
    %v989 = vld [vmem:[#allocation2 + $0x160] sm:$0xff]
    %v990 = vld [vmem:[#allocation2 + $0x168] sm:$0xff]
    %v991 = vld [vmem:[#allocation2 + $0x170] sm:$0xff]
    %v992 = vld [vmem:[#allocation2 + $0x178] sm:$0xff]
    %v993 = vld [vmem:[#allocation2 + $0x180] sm:$0xff]
    %v994 = vld [vmem:[#allocation2 + $0x188] sm:$0xff]
    %v995 = vld [vmem:[#allocation2 + $0x190] sm:$0xff]
    %v996 = vld [vmem:[#allocation2 + $0x198] sm:$0xff]
    %v997 = vld [vmem:[#allocation2 + $0x1a0] sm:$0xff]
    %v998 = vld [vmem:[#allocation2 + $0x1a8] sm:$0xff]
    %vm999 = vcmask 588800
    %v1001 = vsel %vm999, %v551, 0
    %v1004 = vsel %vm999, %v552, 0
    %1006 = vmatprep.subr.mxu0 %v946
    %1007 = vmatpush1.msra.mxu0 %v945
    %1008 = vmatprep.subr.mxu0 %v952
    %1009 = vmatpush1.msra.mxu0 %v951
    %1010 = vmatprep.subr.mxu0 %v958
    %1011 = vmatpush1.msra.mxu0 %v957
    %1012 = vmatprep.subr.mxu0 %v964
    %1013 = vmatpush1.msra.mxu0 %v963
    %1014 = vmatprep.subr.mxu0 %v970
    %1015 = vmatpush1.msra.mxu0 %v969
    %1016 = vmatprep.subr.mxu0 %v976
    %1017 = vmatpush1.msra.mxu0 %v975
    %1018 = vmatprep.subr.mxu0 %v982
    %1019 = vmatpush1.msra.mxu0 %v981
    %1020 = vmatprep.subr.mxu0 %v988
    %1021 = vmatpush1.msra.mxu0 %v987
    %1022 = vmatprep.subr.mxu0 %v994
    %1023 = vmatpush1.msra.mxu0 %v993
    %1024 = vmatprep.subr.mxu0 0.0
    %1025 = vmatpush1.msra.mxu0 0.0
    %1026 = vmatprep.subr.mxu0 0.0
    %1027 = vmatpush1.msra.mxu0 0.0
    %1028 = vmatprep.subr.mxu0 0.0
    %1029 = vmatpush1.msra.mxu0 0.0
    %1030 = vmatprep.subr.mxu0 0.0
    %1031 = vmatpush1.msra.mxu0 0.0
    %1032 = vmatprep.subr.mxu0 0.0
    %1033 = vmatpush1.msra.mxu0 0.0
    %1034 = vmatprep.subr.mxu0 0.0
    %1035 = vmatpush1.msra.mxu0 0.0
    %1036 = vmatprep.subr.mxu0 0.0
    %1037 = vmatpush1.msra.mxu0 0.0
    %1038 = vmatprep.subr.mxu0 0.0
    %1039 = vmatpush1.msra.mxu0 0.0
    %1040 = vmatprep.subr.mxu0 0.0
    %1041 = vmatpush1.msra.mxu0 0.0
    %1042 = vmatprep.subr.mxu0 0.0
    %1043 = vmatpush1.msra.mxu0 0.0
    %1044 = vmatprep.subr.mxu0 0.0
    %1045 = vmatpush1.msra.mxu0 0.0
    %1046 = vmatprep.subr.mxu0 0.0
    %1047 = vmatpush1.msra.mxu0 0.0
    %1048 = vmatprep.subr.mxu0 0.0
    %1049 = vmatpush1.msra.mxu0 0.0
    %1050 = vmatprep.subr.mxu0 0.0
    %1051 = vmatpush1.msra.mxu0 0.0
    %1052 = vmatprep.subr.mxu0 0.0
    %1053 = vmatpush1.msra.mxu0 0.0
    %1054 = vmatprep.subr.mxu0 0.0
    %1055 = vmatpush1.msra.mxu0 0.0
    %1056 = vmatprep.subr.mxu0 0.0
    %1057 = vmatpush1.msra.mxu0 0.0
    %1058 = vmatprep.subr.mxu0 0.0
    %1059 = vmatpush1.msra.mxu0 0.0
    %1060 = vmatprep.subr.mxu0 0.0
    %1061 = vmatpush1.msra.mxu0 0.0
    %1062 = vmatprep.subr.mxu0 0.0
    %1063 = vmatpush1.msra.mxu0 0.0
    %1064 = vmatprep.subr.mxu0 0.0
    %1065 = vmatpush1.msra.mxu0 0.0
    %1066 = vmatprep.subr.mxu0 0.0
    %1067 = vmatpush1.msra.mxu0 0.0
    %1068 = vmatprep.subr.mxu0 0.0
    %1069 = vmatpush1.msra.mxu0 0.0
    %1070 = vmatprep.mubr.f32.mxu0 0.0
    %1071 = vmatmul.mubr.f32.gmra.mrb[0].mxu0 %v1001
    %v1072 = vpop.f32.mrb[0].mxu0
    %v1073 = vadd.f32 0.0, %v1072
    %v1074 = vpop.f32.mrb[0].mxu0
    %v1075 = vadd.f32 0.0, %v1074
    %1076 = vmatprep.mubr.f32.mxu0 0.0
    %1077 = vmatmul.mubr.f32.gmra.mrb[0].mxu0 %v1004
    %v1078 = vpop.f32.mrb[0].mxu0
    %v1079 = vadd.f32 0.0, %v1078
    %v1080 = vpop.f32.mrb[0].mxu0
    %v1081 = vadd.f32 0.0, %v1080
    %1082 = vdwg.mxu0
    %1083 = vmatprep.subr.mxu0 %v948
    %1084 = vmatpush1.msra.mxu0 %v947
    %1085 = vmatprep.subr.mxu0 %v954
    %1086 = vmatpush1.msra.mxu0 %v953
    %1087 = vmatprep.subr.mxu0 %v960
    %1088 = vmatpush1.msra.mxu0 %v959
    %1089 = vmatprep.subr.mxu0 %v966
    %1090 = vmatpush1.msra.mxu0 %v965
    %1091 = vmatprep.subr.mxu0 %v972
    %1092 = vmatpush1.msra.mxu0 %v971
    %1093 = vmatprep.subr.mxu0 %v978
    %1094 = vmatpush1.msra.mxu0 %v977
    %1095 = vmatprep.subr.mxu0 %v984
    %1096 = vmatpush1.msra.mxu0 %v983
    %1097 = vmatprep.subr.mxu0 %v990
    %1098 = vmatpush1.msra.mxu0 %v989
    %1099 = vmatprep.subr.mxu0 %v996
    %1100 = vmatpush1.msra.mxu0 %v995
    %1101 = vmatprep.subr.mxu0 0.0
    %1102 = vmatpush1.msra.mxu0 0.0
    %1103 = vmatprep.subr.mxu0 0.0
    %1104 = vmatpush1.msra.mxu0 0.0
    %1105 = vmatprep.subr.mxu0 0.0
    %1106 = vmatpush1.msra.mxu0 0.0
    %1107 = vmatprep.subr.mxu0 0.0
    %1108 = vmatpush1.msra.mxu0 0.0
    %1109 = vmatprep.subr.mxu0 0.0
    %1110 = vmatpush1.msra.mxu0 0.0
    %1111 = vmatprep.subr.mxu0 0.0
    %1112 = vmatpush1.msra.mxu0 0.0
    %1113 = vmatprep.subr.mxu0 0.0
    %1114 = vmatpush1.msra.mxu0 0.0
    %1115 = vmatprep.subr.mxu0 0.0
    %1116 = vmatpush1.msra.mxu0 0.0
    %1117 = vmatprep.subr.mxu0 0.0
    %1118 = vmatpush1.msra.mxu0 0.0
    %1119 = vmatprep.subr.mxu0 0.0
    %1120 = vmatpush1.msra.mxu0 0.0
    %1121 = vmatprep.subr.mxu0 0.0
    %1122 = vmatpush1.msra.mxu0 0.0
    %1123 = vmatprep.subr.mxu0 0.0
    %1124 = vmatpush1.msra.mxu0 0.0
    %1125 = vmatprep.subr.mxu0 0.0
    %1126 = vmatpush1.msra.mxu0 0.0
    %1127 = vmatprep.subr.mxu0 0.0
    %1128 = vmatpush1.msra.mxu0 0.0
    %1129 = vmatprep.subr.mxu0 0.0
    %1130 = vmatpush1.msra.mxu0 0.0
    %1131 = vmatprep.subr.mxu0 0.0
    %1132 = vmatpush1.msra.mxu0 0.0
    %1133 = vmatprep.subr.mxu0 0.0
    %1134 = vmatpush1.msra.mxu0 0.0
    %1135 = vmatprep.subr.mxu0 0.0
    %1136 = vmatpush1.msra.mxu0 0.0
    %1137 = vmatprep.subr.mxu0 0.0
    %1138 = vmatpush1.msra.mxu0 0.0
    %1139 = vmatprep.subr.mxu0 0.0
    %1140 = vmatpush1.msra.mxu0 0.0
    %1141 = vmatprep.subr.mxu0 0.0
    %1142 = vmatpush1.msra.mxu0 0.0
    %1143 = vmatprep.subr.mxu0 0.0
    %1144 = vmatpush1.msra.mxu0 0.0
    %1145 = vmatprep.subr.mxu0 0.0
    %1146 = vmatpush1.msra.mxu0 0.0
    %1147 = vmatprep.mubr.f32.mxu0 0.0
    %1148 = vmatmul.mubr.f32.gmra.mrb[0].mxu0 %v1001
    %v1149 = vpop.f32.mrb[0].mxu0
    %v1150 = vadd.f32 0.0, %v1149
    %v1151 = vpop.f32.mrb[0].mxu0
    %v1152 = vadd.f32 0.0, %v1151
    %1153 = vmatprep.mubr.f32.mxu0 0.0
    %1154 = vmatmul.mubr.f32.gmra.mrb[0].mxu0 %v1004
    %v1155 = vpop.f32.mrb[0].mxu0
    %v1156 = vadd.f32 0.0, %v1155
    %v1157 = vpop.f32.mrb[0].mxu0
    %v1158 = vadd.f32 0.0, %v1157
    %1159 = vdwg.mxu0
    %1160 = vmatprep.subr.mxu0 %v950
    %1161 = vmatpush1.msra.mxu0 %v949
    %1162 = vmatprep.subr.mxu0 %v956
    %1163 = vmatpush1.msra.mxu0 %v955
    %1164 = vmatprep.subr.mxu0 %v962
    %1165 = vmatpush1.msra.mxu0 %v961
    %1166 = vmatprep.subr.mxu0 %v968
    %1167 = vmatpush1.msra.mxu0 %v967
    %1168 = vmatprep.subr.mxu0 %v974
    %1169 = vmatpush1.msra.mxu0 %v973
    %1170 = vmatprep.subr.mxu0 %v980
    %1171 = vmatpush1.msra.mxu0 %v979
    %1172 = vmatprep.subr.mxu0 %v986
    %1173 = vmatpush1.msra.mxu0 %v985
    %1174 = vmatprep.subr.mxu0 %v992
    %1175 = vmatpush1.msra.mxu0 %v991
    %1176 = vmatprep.subr.mxu0 %v998
    %1177 = vmatpush1.msra.mxu0 %v997
    %1178 = vmatprep.subr.mxu0 0.0
    %1179 = vmatpush1.msra.mxu0 0.0
    %1180 = vmatprep.subr.mxu0 0.0
    %1181 = vmatpush1.msra.mxu0 0.0
    %1182 = vmatprep.subr.mxu0 0.0
    %1183 = vmatpush1.msra.mxu0 0.0
    %1184 = vmatprep.subr.mxu0 0.0
    %1185 = vmatpush1.msra.mxu0 0.0
    %1186 = vmatprep.subr.mxu0 0.0
    %1187 = vmatpush1.msra.mxu0 0.0
    %1188 = vmatprep.subr.mxu0 0.0
    %1189 = vmatpush1.msra.mxu0 0.0
    %1190 = vmatprep.subr.mxu0 0.0
    %1191 = vmatpush1.msra.mxu0 0.0
    %1192 = vmatprep.subr.mxu0 0.0
    %1193 = vmatpush1.msra.mxu0 0.0
    %1194 = vmatprep.subr.mxu0 0.0
    %1195 = vmatpush1.msra.mxu0 0.0
    %1196 = vmatprep.subr.mxu0 0.0
    %1197 = vmatpush1.msra.mxu0 0.0
    %1198 = vmatprep.subr.mxu0 0.0
    %1199 = vmatpush1.msra.mxu0 0.0
    %1200 = vmatprep.subr.mxu0 0.0
    %1201 = vmatpush1.msra.mxu0 0.0
    %1202 = vmatprep.subr.mxu0 0.0
    %1203 = vmatpush1.msra.mxu0 0.0
    %1204 = vmatprep.subr.mxu0 0.0
    %1205 = vmatpush1.msra.mxu0 0.0
    %1206 = vmatprep.subr.mxu0 0.0
    %1207 = vmatpush1.msra.mxu0 0.0
    %1208 = vmatprep.subr.mxu0 0.0
    %1209 = vmatpush1.msra.mxu0 0.0
    %1210 = vmatprep.subr.mxu0 0.0
    %1211 = vmatpush1.msra.mxu0 0.0
    %1212 = vmatprep.subr.mxu0 0.0
    %1213 = vmatpush1.msra.mxu0 0.0
    %1214 = vmatprep.subr.mxu0 0.0
    %1215 = vmatpush1.msra.mxu0 0.0
    %1216 = vmatprep.subr.mxu0 0.0
    %1217 = vmatpush1.msra.mxu0 0.0
    %1218 = vmatprep.subr.mxu0 0.0
    %1219 = vmatpush1.msra.mxu0 0.0
    %1220 = vmatprep.subr.mxu0 0.0
    %1221 = vmatpush1.msra.mxu0 0.0
    %1222 = vmatprep.subr.mxu0 0.0
    %1223 = vmatpush1.msra.mxu0 0.0
    %1224 = vmatprep.mubr.f32.mxu0 0.0
    %1225 = vmatmul.mubr.f32.gmra.mrb[0].mxu0 %v1001
    %v1226 = vpop.f32.mrb[0].mxu0
    %v1227 = vadd.f32 0.0, %v1226
    %v1228 = vpop.f32.mrb[0].mxu0
    %v1229 = vadd.f32 0.0, %v1228
    %1230 = vmatprep.mubr.f32.mxu0 0.0
    %1231 = vmatmul.mubr.f32.gmra.mrb[0].mxu0 %v1004
    %v1232 = vpop.f32.mrb[0].mxu0
    %v1233 = vadd.f32 0.0, %v1232
    %v1234 = vpop.f32.mrb[0].mxu0
    %v1235 = vadd.f32 0.0, %v1234
    %1236 = vdwg.mxu0
    %1237 = vst [vmem:[#allocation3] sm:$0xff] %v1073
    %1238 = vst [vmem:[#allocation3 + $0x8] sm:$0xff] %v1075
    %1239 = vst [vmem:[#allocation3 + $0x10] sm:$0xff] %v1150
    %1240 = vst [vmem:[#allocation3 + $0x18] sm:$0xff] %v1152
    %1241 = vst [vmem:[#allocation3 + $0x20] sm:$0xff] %v1227
    %1242 = vst [vmem:[#allocation3 + $0x28] sm:$0xff] %v1229
    %1243 = vst [vmem:[#allocation3 + $0x30] sm:$0xff] %v1079
    %1244 = vst [vmem:[#allocation3 + $0x38] sm:$0xff] %v1081
    %1245 = vst [vmem:[#allocation3 + $0x40] sm:$0xff] %v1156
    %1246 = vst [vmem:[#allocation3 + $0x48] sm:$0xff] %v1158
    %1247 = vst [vmem:[#allocation3 + $0x50] sm:$0xff] %v1233
    %1248 = vst [vmem:[#allocation3 + $0x58] sm:$0xff] %v1235
    // Predicated region
    $region30: #{tpu_custom_call.1} parent=1 // pred_check
      _
    $region31: #{tpu_custom_call.1} parent=1 // pred_check_branch
      %1250 = sbr.rel (0) target = $region33
    $region32: #{tpu_custom_call.1} parent=1 // pred_region
      %s1252 = ssub.s32 1536, 1536
      %1253 = vsyncadd [#allocation4], %s1252
      %s1254 = sshll.u32 [#allocation3], 4
      %s1255 = int_to_ptr.vmem [resolvable:$true] %s1254
      %1260 = dma.vmem_to_hbm [thread:$0]  %s1255, 1536, %s7, [#allocation4], 768, 768, 48
    $region33: #{tpu_custom_call.1} parent=1 // pred_fallthru
      _
    // Predicated region
    $region34: #{tpu_custom_call.1} parent=1 // pred_check
      _
    $region35: #{tpu_custom_call.1} parent=1 // pred_check_branch
      %1262 = sbr.rel (0) target = $region37
    $region36: #{tpu_custom_call.1} parent=1 // pred_region
      %1263 = dma.done [#allocation4], 1536
    $region37: #{tpu_custom_call.1} parent=1 // pred_fallthru
      _
    %1264 = vsyncpa [#allocation4], 1

</llo_original>
